<compile_context>
chip_gen: v7x
topology: tpu7x:2x2x1
jax: 0.10.0
libtpu: 0.0.40
codegen_flags: <defaults>
</compile_context>

<pallas_src>
import jax
import jax.numpy as jnp
from jax import lax
from jax.experimental import pallas as pl
from jax.experimental.pallas import tpu as pltpu


def _round_up(x: int, m: int) -> int:
    return -(-x // m) * m


# ----------------------------------------------------------------------------
# Per-generation configuration (VMEM budget, default time block, megacore split)
# ----------------------------------------------------------------------------
def _tpu_config():
    vmem_cap = 128 * 1024 * 1024
    try:
        info = pltpu.get_tpu_info()
        vmem_cap = int(getattr(info, "vmem_capacity_bytes", vmem_cap))
    except Exception:          # host-side probe only; safe conservative default
        pass
    is_v7x = False
    try:
        kind = jax.devices()[0].device_kind.lower()
        is_v7x = any(t in kind for t in ("v7", "7x", "tpu7"))
    except Exception:
        pass
    if is_v7x or vmem_cap <= 64 * 1024 * 1024:
        # v7x: 64 MiB VMEM per TC, 2 TensorCores per chip.
        return dict(vmem_budget=56 * 1024 * 1024, tt_target=32, split_batch=True)
    # v5e / v6e: 128 MiB VMEM, single TensorCore.
    return dict(vmem_budget=100 * 1024 * 1024, tt_target=64, split_batch=False)


def _vmem_bytes(Tt, Bb, H_pad, G_pad):
    """Conservative VMEM estimate for one grid step (double-buffered I/O)."""
    gx = 2 * Tt * Bb * G_pad * 2           # bf16 gate stream, double-buffered
    out = 2 * Tt * Bb * H_pad * 4          # f32 output block, double-buffered
    whh = H_pad * G_pad * 2                # bf16 recurrent weight (VMEM scratch, x1)
    state = 2 * Bb * H_pad * 4             # h/c scratch
    hncn = 2 * 2 * Bb * H_pad * 4          # hn/cn output blocks
    misc = 2 * Bb * 4 + (1 << 16)
    return gx + out + whh + state + hncn + misc


def _choose_tiling(T, B, H_pad, G_pad, cfg, time_block=None):
    tt_target = time_block if time_block is not None else cfg["tt_target"]
    budget = cfg["vmem_budget"]
    B8 = _round_up(max(B, 1), 8)
    # Largest batch block first: whole (8-aligned) batch if it fits, else
    # power-of-two blocks (all >=16 so bf16 sublane packing stays aligned).
    bb_cands = [min(B8, 256)] + [c for c in (128, 64, 32, 16) if c < min(B8, 256)]
    Bb = Tt = None
    for cand in bb_cands:
        tt = max(1, min(tt_target, T))
        while tt > 8 and _vmem_bytes(tt, cand, H_pad, G_pad) > budget:
            tt = max(8, tt // 2)
        if _vmem_bytes(tt, cand, H_pad, G_pad) <= budget:
            Bb, Tt = cand, tt
            break
    if Bb is None:                          # extreme H: smallest sane tiles
        Bb, Tt = (16 if B8 > 8 else 8), max(1, min(8, T))
    B_pad = _round_up(B8, Bb)
    # v7x: if the whole batch landed in a single block, split it so the
    # "parallel" grid axis actually shards across the two TensorCores.
    if cfg["split_batch"] and (B_pad // Bb) == 1 and Bb >= 32:
        Bb = _round_up(Bb // 2, 16)
        B_pad = _round_up(B8, Bb)
    T_pad = _round_up(T, Tt)
    return Tt, Bb, T_pad, B_pad


# ----------------------------------------------------------------------------
# Kernel: one grid step == one (batch block, time block) of Tt timesteps.
# ----------------------------------------------------------------------------
def _lstm_kernel(maxlen_ref, gx_ref, len_ref, whh_hbm, out_ref, hn_ref, cn_ref,
                 whh_vmem, w_sem, h_sc, c_sc):
    """
    maxlen_ref: (n_bb,)         int32, scalar-prefetched per-batch-block max length
    gx_ref    : (Tt, Bb, 4*Hp)  bf16, precomputed x @ W_ih^T + b for this block
    len_ref   : (Bb, 1)         int32 sequence lengths
    whh_hbm   : (Hp, 4*Hp)      bf16 recurrent weight in HBM (memory_space=ANY)
    out_ref   : (Tt, Bb, Hp)    f32 padded LSTM output block
    hn/cn_ref : (Bb, Hp)        f32 final state (written on last time block)
    whh_vmem  : (Hp, 4*Hp)      bf16 VMEM-resident copy of whh_hbm
    w_sem     : DMA semaphore for the whh copy
    h_sc/c_sc : (Bb, Hp)        f32 state carried across time blocks in VMEM
    """
    bb = pl.program_id(0)
    tb = pl.program_id(1)                  # time-block index (sequential axis)
    TT = gx_ref.shape[0]                   # timesteps per block (static)
    Hp = hn_ref.shape[-1]                  # padded hidden size (static)

    @pl.when(tb == 0)
    def _init():
        h_sc[...] = jnp.zeros_like(h_sc)
        c_sc[...] = jnp.zeros_like(c_sc)
        # Load the loop-invariant recurrent weight ONCE per batch block.
        cp = pltpu.make_async_copy(whh_hbm, whh_vmem, w_sem.at[0])
        cp.start()
        cp.wait()

    t0 = tb * TT
    active = t0 < maxlen_ref[bb]           # any valid timestep in this block?

    @pl.when(active)
    def _run():
        whh = whh_vmem[...]                # bf16 (Hp, 4Hp), hoisted
        lens = len_ref[...]                # (Bb, 1) int32

        def step(s, carry):
            h, c = carry                   # f32 (Bb, Hp)
            # Only the recurrent matmul is on the serial critical path; inputs
            # were projected outside the kernel.  bf16 MXU inputs, f32 acc.
            gates = gx_ref[s].astype(jnp.float32) + jnp.dot(
                h.astype(jnp.bfloat16), whh, preferred_element_type=jnp.float32)
            i = jax.nn.sigmoid(gates[:, 0 * Hp:1 * Hp])
            f = jax.nn.sigmoid(gates[:, 1 * Hp:2 * Hp])
            g = jnp.tanh(gates[:, 2 * Hp:3 * Hp])
            o = jax.nn.sigmoid(gates[:, 3 * Hp:4 * Hp])
            c_new = f * c + i * g
            h_new = o * jnp.tanh(c_new)
            # packed-sequence semantics: freeze state past each sequence's
            # length, zero the padded output positions.
            valid = lens > (t0 + s)        # (Bb, 1) bool
            c_u = jnp.where(valid, c_new, c)
            h_u = jnp.where(valid, h_new, h)
            out_ref[s] = jnp.where(valid, h_new, jnp.float32(0.0))
            return (h_u, c_u)

        h_f, c_f = lax.fori_loop(0, TT, step, (h_sc[...], c_sc[...]),
                                 unroll=min(TT, 8))
        h_sc[...] = h_f
        c_sc[...] = c_f

    @pl.when(jnp.logical_not(active))
    def _skip():
        # Entire block is past every sequence's length: just emit zeros.
        out_ref[...] = jnp.zeros_like(out_ref)

    # hn/cn blocks are grid-resident across the (innermost, "arbitrary") time
    # axis; a single write on the final time block suffices because the state
    # is already frozen per-sequence.
    @pl.when(tb == pl.num_programs(1) - 1)
    def _finalize():
        hn_ref[...] = h_sc[...]
        cn_ref[...] = c_sc[...]


# ----------------------------------------------------------------------------
# Wrapper
# ----------------------------------------------------------------------------
def lstm_encoder_forward(input_, lengths, emb_table, w_ih, w_hh, b_ih, b_hh,
                         *, time_block=None):
    """Forward pass of LstmEncoder.

    Returns (emb, (output, (h_n, c_n))) mirroring the PyTorch module's
    (emb, (output, LstmStateTuple(state))).
    """
    cfg = _tpu_config()

    # Embedding lookup (gather) is glue in plain JAX.
    emb = jnp.take(emb_table, input_, axis=0).astype(jnp.float32)   # (T, B, E)
    T, B, E = emb.shape
    H = w_hh.shape[1]

    # ---- (8, 128)-friendly padding & per-generation tiling ----------------
    H_pad = _round_up(H, 128)             # lane-aligned hidden size
    G_pad = 4 * H_pad
    Tt, Bb, T_pad, B_pad = _choose_tiling(T, B, H_pad, G_pad, cfg, time_block)
    n_bb = B_pad // Bb
    n_tb = T_pad // Tt

    # Pad the 4H gate axis per gate, so gate g occupies columns
    # [g*H_pad, g*H_pad + H) and in-kernel gate extraction is lane-aligned.
    def _pad_gate_cols(w_t):              # (K, 4H) -> (K, 4*H_pad)
        K = w_t.shape[0]
        return jnp.pad(w_t.reshape(K, 4, H),
                       ((0, 0), (0, 0), (0, H_pad - H))).reshape(K, G_pad)

    wih_tp = _pad_gate_cols(jnp.transpose(w_ih).astype(jnp.float32))   # (E, 4Hp)
    whh_tp = _pad_gate_cols(jnp.transpose(w_hh).astype(jnp.float32))   # (H, 4Hp)
    whh_tp = jnp.pad(whh_tp, ((0, H_pad - H), (0, 0)))                 # (Hp, 4Hp)
    whh_bf16 = whh_tp.astype(jnp.bfloat16)                             # MXU input
    bias_p = jnp.pad((b_ih + b_hh).astype(jnp.float32).reshape(4, H),
                     ((0, 0), (0, H_pad - H))).reshape(G_pad)

    emb_p = jnp.pad(emb, ((0, T_pad - T), (0, B_pad - B), (0, 0)))
    len_p = jnp.pad(lengths.astype(jnp.int32), (0, B_pad - B)).reshape(B_pad, 1)

    # Per-batch-block max length (scalar prefetch) for skipping padded blocks.
    maxlen_blocks = jnp.max(len_p.reshape(n_bb, Bb), axis=1).astype(jnp.int32)

    # ---- hoisted input projection: one big XLA matmul, bias folded in -----
    # Streamed into the kernel in bf16 (dominant HBM read), widened in-kernel.
    gates_x = (emb_p.reshape(T_pad * B_pad, E) @ wih_tp + bias_p
               ).astype(jnp.bfloat16).reshape(T_pad, B_pad, G_pad)

    vmem_limit = int(cfg["vmem_budget"] + 4 * 1024 * 1024)

    out, h_n, c_n = pl.pallas_call(
        _lstm_kernel,
        out_shape=(
            jax.ShapeDtypeStruct((T_pad, B_pad, H_pad), jnp.float32),
            jax.ShapeDtypeStruct((B_pad, H_pad), jnp.float32),
            jax.ShapeDtypeStruct((B_pad, H_pad), jnp.float32),
        ),
        grid_spec=pltpu.PrefetchScalarGridSpec(
            num_scalar_prefetch=1,
            grid=(n_bb, n_tb),
            in_specs=[
                pl.BlockSpec((Tt, Bb, G_pad), lambda bb, tb, ml: (tb, bb, 0)),
                pl.BlockSpec((Bb, 1), lambda bb, tb, ml: (bb, 0)),
                pl.BlockSpec(memory_space=pl.ANY),       # whh: raw HBM ref
            ],
            out_specs=[
                pl.BlockSpec((Tt, Bb, H_pad), lambda bb, tb, ml: (tb, bb, 0)),
                pl.BlockSpec((Bb, H_pad), lambda bb, tb, ml: (bb, 0)),
                pl.BlockSpec((Bb, H_pad), lambda bb, tb, ml: (bb, 0)),
            ],
            scratch_shapes=[
                pltpu.VMEM((H_pad, G_pad), jnp.bfloat16),   # resident W_hh
                pltpu.SemaphoreType.DMA((1,)),               # its DMA semaphore
                pltpu.VMEM((Bb, H_pad), jnp.float32),        # h state
                pltpu.VMEM((Bb, H_pad), jnp.float32),        # c state
            ],
        ),
        compiler_params=pltpu.CompilerParams(
            dimension_semantics=("parallel", "arbitrary"),
            vmem_limit_bytes=vmem_limit,
        ),
    )(maxlen_blocks, gates_x, len_p, whh_bf16)

    # pad_packed_sequence pads to the batch max length; drop = Dropout(0.0).
    t_out = int(jnp.max(lengths))
    output = out[:t_out, :B, :H]
    h_n = h_n[:B, :H][None]
    c_n = c_n[:B, :H][None]
    return emb, (output, (h_n, c_n))


# ----------------------------------------------------------------------------
# Pure-JAX reference (masked scan) replicating packed-LSTM semantics.
# ----------------------------------------------------------------------------
def _reference_forward(input_, lengths, emb_table, w_ih, w_hh, b_ih, b_hh):
    emb = jnp.take(emb_table, input_, axis=0).astype(jnp.float32)
    T, B, E = emb.shape
    H = w_hh.shape[1]
    b = (b_ih + b_hh)

    def step(carry, xs):
        h, c = carry
        x, t = xs
        gates = x @ w_ih.T + h @ w_hh.T + b
        i = jax.nn.sigmoid(gates[:, 0 * H:1 * H])
        f = jax.nn.sigmoid(gates[:, 1 * H:2 * H])
        g = jnp.tanh(gates[:, 2 * H:3 * H])
        o = jax.nn.sigmoid(gates[:, 3 * H:4 * H])
        c_new = f * c + i * g
        h_new = o * jnp.tanh(c_new)
        valid = (lengths > t)[:, None]
        c_upd = jnp.where(valid, c_new, c)
        h_upd = jnp.where(valid, h_new, h)
        out_t = jnp.where(valid, h_new, 0.0)
        return (h_upd, c_upd), out_t

    init = (jnp.zeros((B, H), jnp.float32), jnp.zeros((B, H), jnp.float32))
    (h_n, c_n), out = jax.lax.scan(step, init, (emb, jnp.arange(T)))
    return emb, (out, (h_n[None], c_n[None]))


if __name__ == "__main__":
    key = jax.random.PRNGKey(0)
    k_emb, k_wih, k_whh, k_bih, k_bhh, k_in = jax.random.split(key, 6)

    # small shapes consistent with the module
    VOCAB, E, H = 16, 32, 32      # emb dim == lstm input_size
    T, B = 8, 2

    emb_table = jax.random.normal(k_emb, (VOCAB, E), jnp.float32) * 0.1
    bound = 1.0 / jnp.sqrt(H)
    w_ih = jax.random.uniform(k_wih, (4 * H, E), jnp.float32, -bound, bound)
    w_hh = jax.random.uniform(k_whh, (4 * H, H), jnp.float32, -bound, bound)
    b_ih = jax.random.uniform(k_bih, (4 * H,), jnp.float32, -bound, bound)
    b_hh = jax.random.uniform(k_bhh, (4 * H,), jnp.float32, -bound, bound)

    input_ = jax.random.randint(k_in, (T, B), 0, VOCAB, dtype=jnp.int32)

    # bf16 MXU inputs / bf16 gate streaming -> loosened tolerance vs f32 ref.
    TOL = 2e-2

    # --- case 1: default tiling (single time block) -------------------------
    lengths = jnp.array([8, 5], dtype=jnp.int32)
    emb, (output, (h_n, c_n)) = lstm_encoder_forward(
        input_, lengths, emb_table, w_ih, w_hh, b_ih, b_hh)
    jax.block_until_ready((emb, output, h_n, c_n))

    r_emb, (r_out, (r_h, r_c)) = _reference_forward(
        input_, lengths, emb_table, w_ih, w_hh, b_ih, b_hh)
    t_out = int(jnp.max(lengths))
    assert jnp.allclose(emb, r_emb, atol=1e-5)
    assert jnp.allclose(output, r_out[:t_out], atol=TOL)
    assert jnp.allclose(h_n, r_h, atol=TOL)
    assert jnp.allclose(c_n, r_c, atol=TOL)

    # --- case 2: small time blocks -> exercises multi-block carry + the
    #             scalar-prefetch skip of fully-padded time blocks -----------
    lengths2 = jnp.array([5, 3], dtype=jnp.int32)
    emb2, (output2, (h_n2, c_n2)) = lstm_encoder_forward(
        input_, lengths2, emb_table, w_ih, w_hh, b_ih, b_hh, time_block=2)
    jax.block_until_ready((emb2, output2, h_n2, c_n2))

    r_emb2, (r_out2, (r_h2, r_c2)) = _reference_forward(
        input_, lengths2, emb_table, w_ih, w_hh, b_ih, b_hh)
    t_out2 = int(jnp.max(lengths2))
    assert jnp.allclose(emb2, r_emb2, atol=1e-5)
    assert jnp.allclose(output2, r_out2[:t_out2], atol=TOL)
    assert jnp.allclose(h_n2, r_h2, atol=TOL)
    assert jnp.allclose(c_n2, r_c2, atol=TOL)

    print("KERNEL_OK")
</pallas_src>

<mosaic_0001>
module attributes {stable_mosaic.version = 11 : i64} {
  func.func @_lstm_kernel(%arg0: i32, %arg1: i32, %arg2: memref<1xi32, #tpu.memory_space<smem>>, %arg3: memref<8x8x512xbf16, #tpu.memory_space<vmem>>, %arg4: memref<8x1xi32, #tpu.memory_space<vmem>>, %arg5: memref<128x512xbf16, #tpu.memory_space<any>>, %arg6: memref<8x8x128xf32, #tpu.memory_space<vmem>>, %arg7: memref<8x128xf32, #tpu.memory_space<vmem>>, %arg8: memref<8x128xf32, #tpu.memory_space<vmem>>, %arg9: memref<128x512xbf16, #tpu.memory_space<vmem>>, %arg10: memref<1x!tpu.dma_semaphore, #tpu.memory_space<semaphore_mem>>, %arg11: memref<8x128xf32, #tpu.memory_space<vmem>>, %arg12: memref<8x128xf32, #tpu.memory_space<vmem>>) attributes {dimension_semantics = [#tpu.dimension_semantics<parallel>, #tpu.dimension_semantics<arbitrary>], iteration_bounds = array<i64: 1, 1>, scalar_prefetch = 1 : i64, scratch_operands = 4 : i64, tpu.core_type = #tpu.core_type<tc>, window_params = [{transform_indices = @transform_0, window_bounds = array<i64: 8, 8, 512>}, {transform_indices = @transform_1, window_bounds = array<i64: 8, 1>}, {}, {transform_indices = @transform_3, window_bounds = array<i64: 8, 8, 128>}, {transform_indices = @transform_4, window_bounds = array<i64: 8, 128>}, {transform_indices = @transform_5, window_bounds = array<i64: 8, 128>}]} {
    %c0_i32 = arith.constant 0 : i32
    %0 = arith.cmpi eq, %arg1, %c0_i32 : i32
    %1 = arith.extui %0 : i1 to i32
    %c0_i32_0 = arith.constant 0 : i32
    %2 = arith.cmpi ne, %1, %c0_i32_0 : i32
    scf.if %2 {
      %cst = arith.constant 0.000000e+00 : f32
      %15 = vector.broadcast %cst : f32 to vector<8x128xf32>
      %c0 = arith.constant 0 : index
      %c0_5 = arith.constant 0 : index
      %16 = vector.load %arg11[%c0, %c0_5] : memref<8x128xf32, #tpu.memory_space<vmem>>, vector<8x128xf32>
      tpu.vector_store %arg11[%c0, %c0_5], %15 {strides = array<i32>} : memref<8x128xf32, #tpu.memory_space<vmem>>, vector<8x128xf32>,
      %cst_6 = arith.constant 0.000000e+00 : f32
      %17 = vector.broadcast %cst_6 : f32 to vector<8x128xf32>
      %c0_7 = arith.constant 0 : index
      %c0_8 = arith.constant 0 : index
      %18 = vector.load %arg12[%c0_7, %c0_8] : memref<8x128xf32, #tpu.memory_space<vmem>>, vector<8x128xf32>
      tpu.vector_store %arg12[%c0_7, %c0_8], %17 {strides = array<i32>} : memref<8x128xf32, #tpu.memory_space<vmem>>, vector<8x128xf32>,
      %c0_i32_9 = arith.constant 0 : i32
      %19 = tpu.memref_slice %arg10[%c0_i32_9] : memref<1x!tpu.dma_semaphore, #tpu.memory_space<semaphore_mem>> -> memref<1x!tpu.dma_semaphore, #tpu.memory_space<semaphore_mem>>
      %20 = tpu.memref_squeeze %19 : memref<1x!tpu.dma_semaphore, #tpu.memory_space<semaphore_mem>> -> memref<!tpu.dma_semaphore, #tpu.memory_space<semaphore_mem>>
      tpu.enqueue_dma source(%arg5 : memref<128x512xbf16, #tpu.memory_space<any>>) target(%arg9 : memref<128x512xbf16, #tpu.memory_space<vmem>>) target_semaphore(%20 : memref<!tpu.dma_semaphore, #tpu.memory_space<semaphore_mem>>)
      %c0_i32_10 = arith.constant 0 : i32
      %21 = tpu.memref_slice %arg10[%c0_i32_10] : memref<1x!tpu.dma_semaphore, #tpu.memory_space<semaphore_mem>> -> memref<1x!tpu.dma_semaphore, #tpu.memory_space<semaphore_mem>>
      %22 = tpu.memref_squeeze %21 : memref<1x!tpu.dma_semaphore, #tpu.memory_space<semaphore_mem>> -> memref<!tpu.dma_semaphore, #tpu.memory_space<semaphore_mem>>
      tpu.wait_dma2 semaphore(%22 : memref<!tpu.dma_semaphore, #tpu.memory_space<semaphore_mem>>) src(%arg5 : memref<128x512xbf16, #tpu.memory_space<any>>) dst(%arg9 : memref<128x512xbf16, #tpu.memory_space<vmem>>)
    } else {
    }
    %c8_i32 = arith.constant 8 : i32
    %3 = arith.muli %arg1, %c8_i32 : i32
    %4 = arith.index_cast %arg0 : i32 to index
    %5 = memref.load %arg2[%4] : memref<1xi32, #tpu.memory_space<smem>>
    %6 = arith.cmpi slt, %3, %5 : i32
    %7 = arith.extui %6 : i1 to i32
    %c0_i32_1 = arith.constant 0 : i32
    %8 = arith.cmpi ne, %7, %c0_i32_1 : i32
    scf.if %8 {
      %c0 = arith.constant 0 : index
      %c0_5 = arith.constant 0 : index
      %15 = vector.load %arg9[%c0, %c0_5] : memref<128x512xbf16, #tpu.memory_space<vmem>>, vector<128x512xbf16>
      %c0_6 = arith.constant 0 : index
      %c0_7 = arith.constant 0 : index
      %16 = vector.load %arg4[%c0_6, %c0_7] : memref<8x1xi32, #tpu.memory_space<vmem>>, vector<8x1xi32>
      %c0_8 = arith.constant 0 : index
      %c0_9 = arith.constant 0 : index
      %17 = vector.load %arg11[%c0_8, %c0_9] : memref<8x128xf32, #tpu.memory_space<vmem>>, vector<8x128xf32>
      %c0_10 = arith.constant 0 : index
      %c0_11 = arith.constant 0 : index
      %18 = vector.load %arg12[%c0_10, %c0_11] : memref<8x128xf32, #tpu.memory_space<vmem>>, vector<8x128xf32>
      %c0_i32_12 = arith.constant 0 : i32
      %19 = arith.index_cast %c0_i32_12 : i32 to index
      %c0_13 = arith.constant 0 : index
      %c0_14 = arith.constant 0 : index
      %20 = vector.load %arg3[%19, %c0_13, %c0_14] : memref<8x8x512xbf16, #tpu.memory_space<vmem>>, vector<1x8x512xbf16>
      %21 = vector.shape_cast %20 : vector<1x8x512xbf16> to vector<8x512xbf16>
      %22 = arith.extf %21 : vector<8x512xbf16> to vector<8x512xf32>
      %23 = arith.truncf %17 : vector<8x128xf32> to vector<8x128xbf16>
      %cst = arith.constant dense<0.000000e+00> : vector<8x512xf32>
      %24 = tpu.matmul %23, %15, %cst {dimension_numbers = #tpu.dot_dimension_numbers<[1], [0], [0], [1], [0, 0, 1, 1], [], []>} : vector<8x128xbf16>, vector<128x512xbf16>, vector<8x512xf32> -> vector<8x512xf32>
      %25 = arith.addf %22, %24 : vector<8x512xf32>
      %26 = vector.extract_strided_slice %25 {offsets = [0, 0], sizes = [8, 128], strides = [1, 1]} : vector<8x512xf32> to vector<8x128xf32>
      %27 = arith.negf %26 : vector<8x128xf32>
      %28 = math.exp %27 : vector<8x128xf32>
      %cst_15 = arith.constant 1.000000e+00 : f32
      %29 = vector.broadcast %cst_15 : f32 to vector<8x128xf32>
      %30 = arith.addf %29, %28 : vector<8x128xf32>
      %31 = arith.divf %29, %30 : vector<8x128xf32>
      %32 = vector.extract_strided_slice %25 {offsets = [0, 128], sizes = [8, 128], strides = [1, 1]} : vector<8x512xf32> to vector<8x128xf32>
      %33 = arith.negf %32 : vector<8x128xf32>
      %34 = math.exp %33 : vector<8x128xf32>
      %cst_16 = arith.constant 1.000000e+00 : f32
      %35 = vector.broadcast %cst_16 : f32 to vector<8x128xf32>
      %36 = arith.addf %35, %34 : vector<8x128xf32>
      %37 = arith.divf %35, %36 : vector<8x128xf32>
      %38 = vector.extract_strided_slice %25 {offsets = [0, 256], sizes = [8, 128], strides = [1, 1]} : vector<8x512xf32> to vector<8x128xf32>
      %39 = math.tanh %38 : vector<8x128xf32>
      %40 = vector.extract_strided_slice %25 {offsets = [0, 384], sizes = [8, 128], strides = [1, 1]} : vector<8x512xf32> to vector<8x128xf32>
      %41 = arith.negf %40 : vector<8x128xf32>
      %42 = math.exp %41 : vector<8x128xf32>
      %cst_17 = arith.constant 1.000000e+00 : f32
      %43 = vector.broadcast %cst_17 : f32 to vector<8x128xf32>
      %44 = arith.addf %43, %42 : vector<8x128xf32>
      %45 = arith.divf %43, %44 : vector<8x128xf32>
      %46 = arith.mulf %37, %18 : vector<8x128xf32>
      %47 = arith.mulf %31, %39 : vector<8x128xf32>
      %48 = arith.addf %46, %47 : vector<8x128xf32>
      %49 = math.tanh %48 : vector<8x128xf32>
      %50 = arith.mulf %45, %49 : vector<8x128xf32>
      %51 = arith.addi %3, %c0_i32_12 : i32
      %52 = vector.broadcast %51 : i32 to vector<8x1xi32>
      %53 = arith.cmpi sgt, %16, %52 : vector<8x1xi32>
      %54 = vector.shape_cast %53 : vector<8x1xi1> to vector<8x1xi1>
      %55 = vector.broadcast %54 : vector<8x1xi1> to vector<8x128xi1>
      %56 = arith.select %55, %48, %18 : vector<8x128xi1>, vector<8x128xf32>
      %57 = vector.shape_cast %53 : vector<8x1xi1> to vector<8x1xi1>
      %58 = vector.broadcast %57 : vector<8x1xi1> to vector<8x128xi1>
      %59 = arith.select %58, %50, %17 : vector<8x128xi1>, vector<8x128xf32>
      %cst_18 = arith.constant 0.000000e+00 : f32
      %60 = vector.shape_cast %53 : vector<8x1xi1> to vector<8x1xi1>
      %61 = vector.broadcast %60 : vector<8x1xi1> to vector<8x128xi1>
      %62 = vector.broadcast %cst_18 : f32 to vector<8x128xf32>
      %63 = arith.select %61, %50, %62 : vector<8x128xi1>, vector<8x128xf32>
      %64 = arith.index_cast %c0_i32_12 : i32 to index
      %c0_19 = arith.constant 0 : index
      %c0_20 = arith.constant 0 : index
      %65 = vector.load %arg6[%64, %c0_19, %c0_20] : memref<8x8x128xf32, #tpu.memory_space<vmem>>, vector<1x8x128xf32>
      %66 = vector.shape_cast %65 : vector<1x8x128xf32> to vector<8x128xf32>
      %67 = vector.shape_cast %63 : vector<8x128xf32> to vector<1x8x128xf32>
      tpu.vector_store %arg6[%64, %c0_19, %c0_20], %67 {strides = array<i32>} : memref<8x8x128xf32, #tpu.memory_space<vmem>>, vector<1x8x128xf32>,
      %c1_i32 = arith.constant 1 : i32
      %68 = arith.index_cast %c1_i32 : i32 to index
      %c0_21 = arith.constant 0 : index
      %c0_22 = arith.constant 0 : index
      %69 = vector.load %arg3[%68, %c0_21, %c0_22] : memref<8x8x512xbf16, #tpu.memory_space<vmem>>, vector<1x8x512xbf16>
      %70 = vector.shape_cast %69 : vector<1x8x512xbf16> to vector<8x512xbf16>
      %71 = arith.extf %70 : vector<8x512xbf16> to vector<8x512xf32>
      %72 = arith.truncf %59 : vector<8x128xf32> to vector<8x128xbf16>
      %cst_23 = arith.constant dense<0.000000e+00> : vector<8x512xf32>
      %73 = tpu.matmul %72, %15, %cst_23 {dimension_numbers = #tpu.dot_dimension_numbers<[1], [0], [0], [1], [0, 0, 1, 1], [], []>} : vector<8x128xbf16>, vector<128x512xbf16>, vector<8x512xf32> -> vector<8x512xf32>
      %74 = arith.addf %71, %73 : vector<8x512xf32>
      %75 = vector.extract_strided_slice %74 {offsets = [0, 0], sizes = [8, 128], strides = [1, 1]} : vector<8x512xf32> to vector<8x128xf32>
      %76 = arith.negf %75 : vector<8x128xf32>
      %77 = math.exp %76 : vector<8x128xf32>
      %cst_24 = arith.constant 1.000000e+00 : f32
      %78 = vector.broadcast %cst_24 : f32 to vector<8x128xf32>
      %79 = arith.addf %78, %77 : vector<8x128xf32>
      %80 = arith.divf %78, %79 : vector<8x128xf32>
      %81 = vector.extract_strided_slice %74 {offsets = [0, 128], sizes = [8, 128], strides = [1, 1]} : vector<8x512xf32> to vector<8x128xf32>
      %82 = arith.negf %81 : vector<8x128xf32>
      %83 = math.exp %82 : vector<8x128xf32>
      %cst_25 = arith.constant 1.000000e+00 : f32
      %84 = vector.broadcast %cst_25 : f32 to vector<8x128xf32>
      %85 = arith.addf %84, %83 : vector<8x128xf32>
      %86 = arith.divf %84, %85 : vector<8x128xf32>
      %87 = vector.extract_strided_slice %74 {offsets = [0, 256], sizes = [8, 128], strides = [1, 1]} : vector<8x512xf32> to vector<8x128xf32>
      %88 = math.tanh %87 : vector<8x128xf32>
      %89 = vector.extract_strided_slice %74 {offsets = [0, 384], sizes = [8, 128], strides = [1, 1]} : vector<8x512xf32> to vector<8x128xf32>
      %90 = arith.negf %89 : vector<8x128xf32>
      %91 = math.exp %90 : vector<8x128xf32>
      %cst_26 = arith.constant 1.000000e+00 : f32
      %92 = vector.broadcast %cst_26 : f32 to vector<8x128xf32>
      %93 = arith.addf %92, %91 : vector<8x128xf32>
      %94 = arith.divf %92, %93 : vector<8x128xf32>
      %95 = arith.mulf %86, %56 : vector<8x128xf32>
      %96 = arith.mulf %80, %88 : vector<8x128xf32>
      %97 = arith.addf %95, %96 : vector<8x128xf32>
      %98 = math.tanh %97 : vector<8x128xf32>
      %99 = arith.mulf %94, %98 : vector<8x128xf32>
      %100 = arith.addi %3, %c1_i32 : i32
      %101 = vector.broadcast %100 : i32 to vector<8x1xi32>
      %102 = arith.cmpi sgt, %16, %101 : vector<8x1xi32>
      %103 = vector.shape_cast %102 : vector<8x1xi1> to vector<8x1xi1>
      %104 = vector.broadcast %103 : vector<8x1xi1> to vector<8x128xi1>
      %105 = arith.select %104, %97, %56 : vector<8x128xi1>, vector<8x128xf32>
      %106 = vector.shape_cast %102 : vector<8x1xi1> to vector<8x1xi1>
      %107 = vector.broadcast %106 : vector<8x1xi1> to vector<8x128xi1>
      %108 = arith.select %107, %99, %59 : vector<8x128xi1>, vector<8x128xf32>
      %cst_27 = arith.constant 0.000000e+00 : f32
      %109 = vector.shape_cast %102 : vector<8x1xi1> to vector<8x1xi1>
      %110 = vector.broadcast %109 : vector<8x1xi1> to vector<8x128xi1>
      %111 = vector.broadcast %cst_27 : f32 to vector<8x128xf32>
      %112 = arith.select %110, %99, %111 : vector<8x128xi1>, vector<8x128xf32>
      %113 = arith.index_cast %c1_i32 : i32 to index
      %c0_28 = arith.constant 0 : index
      %c0_29 = arith.constant 0 : index
      %114 = vector.load %arg6[%113, %c0_28, %c0_29] : memref<8x8x128xf32, #tpu.memory_space<vmem>>, vector<1x8x128xf32>
      %115 = vector.shape_cast %114 : vector<1x8x128xf32> to vector<8x128xf32>
      %116 = vector.shape_cast %112 : vector<8x128xf32> to vector<1x8x128xf32>
      tpu.vector_store %arg6[%113, %c0_28, %c0_29], %116 {strides = array<i32>} : memref<8x8x128xf32, #tpu.memory_space<vmem>>, vector<1x8x128xf32>,
      %c2_i32 = arith.constant 2 : i32
      %117 = arith.index_cast %c2_i32 : i32 to index
      %c0_30 = arith.constant 0 : index
      %c0_31 = arith.constant 0 : index
      %118 = vector.load %arg3[%117, %c0_30, %c0_31] : memref<8x8x512xbf16, #tpu.memory_space<vmem>>, vector<1x8x512xbf16>
      %119 = vector.shape_cast %118 : vector<1x8x512xbf16> to vector<8x512xbf16>
      %120 = arith.extf %119 : vector<8x512xbf16> to vector<8x512xf32>
      %121 = arith.truncf %108 : vector<8x128xf32> to vector<8x128xbf16>
      %cst_32 = arith.constant dense<0.000000e+00> : vector<8x512xf32>
      %122 = tpu.matmul %121, %15, %cst_32 {dimension_numbers = #tpu.dot_dimension_numbers<[1], [0], [0], [1], [0, 0, 1, 1], [], []>} : vector<8x128xbf16>, vector<128x512xbf16>, vector<8x512xf32> -> vector<8x512xf32>
      %123 = arith.addf %120, %122 : vector<8x512xf32>
      %124 = vector.extract_strided_slice %123 {offsets = [0, 0], sizes = [8, 128], strides = [1, 1]} : vector<8x512xf32> to vector<8x128xf32>
      %125 = arith.negf %124 : vector<8x128xf32>
      %126 = math.exp %125 : vector<8x128xf32>
      %cst_33 = arith.constant 1.000000e+00 : f32
      %127 = vector.broadcast %cst_33 : f32 to vector<8x128xf32>
      %128 = arith.addf %127, %126 : vector<8x128xf32>
      %129 = arith.divf %127, %128 : vector<8x128xf32>
      %130 = vector.extract_strided_slice %123 {offsets = [0, 128], sizes = [8, 128], strides = [1, 1]} : vector<8x512xf32> to vector<8x128xf32>
      %131 = arith.negf %130 : vector<8x128xf32>
      %132 = math.exp %131 : vector<8x128xf32>
      %cst_34 = arith.constant 1.000000e+00 : f32
      %133 = vector.broadcast %cst_34 : f32 to vector<8x128xf32>
      %134 = arith.addf %133, %132 : vector<8x128xf32>
      %135 = arith.divf %133, %134 : vector<8x128xf32>
      %136 = vector.extract_strided_slice %123 {offsets = [0, 256], sizes = [8, 128], strides = [1, 1]} : vector<8x512xf32> to vector<8x128xf32>
      %137 = math.tanh %136 : vector<8x128xf32>
      %138 = vector.extract_strided_slice %123 {offsets = [0, 384], sizes = [8, 128], strides = [1, 1]} : vector<8x512xf32> to vector<8x128xf32>
      %139 = arith.negf %138 : vector<8x128xf32>
      %140 = math.exp %139 : vector<8x128xf32>
      %cst_35 = arith.constant 1.000000e+00 : f32
      %141 = vector.broadcast %cst_35 : f32 to vector<8x128xf32>
      %142 = arith.addf %141, %140 : vector<8x128xf32>
      %143 = arith.divf %141, %142 : vector<8x128xf32>
      %144 = arith.mulf %135, %105 : vector<8x128xf32>
      %145 = arith.mulf %129, %137 : vector<8x128xf32>
      %146 = arith.addf %144, %145 : vector<8x128xf32>
      %147 = math.tanh %146 : vector<8x128xf32>
      %148 = arith.mulf %143, %147 : vector<8x128xf32>
      %149 = arith.addi %3, %c2_i32 : i32
      %150 = vector.broadcast %149 : i32 to vector<8x1xi32>
      %151 = arith.cmpi sgt, %16, %150 : vector<8x1xi32>
      %152 = vector.shape_cast %151 : vector<8x1xi1> to vector<8x1xi1>
      %153 = vector.broadcast %152 : vector<8x1xi1> to vector<8x128xi1>
      %154 = arith.select %153, %146, %105 : vector<8x128xi1>, vector<8x128xf32>
      %155 = vector.shape_cast %151 : vector<8x1xi1> to vector<8x1xi1>
      %156 = vector.broadcast %155 : vector<8x1xi1> to vector<8x128xi1>
      %157 = arith.select %156, %148, %108 : vector<8x128xi1>, vector<8x128xf32>
      %cst_36 = arith.constant 0.000000e+00 : f32
      %158 = vector.shape_cast %151 : vector<8x1xi1> to vector<8x1xi1>
      %159 = vector.broadcast %158 : vector<8x1xi1> to vector<8x128xi1>
      %160 = vector.broadcast %cst_36 : f32 to vector<8x128xf32>
      %161 = arith.select %159, %148, %160 : vector<8x128xi1>, vector<8x128xf32>
      %162 = arith.index_cast %c2_i32 : i32 to index
      %c0_37 = arith.constant 0 : index
      %c0_38 = arith.constant 0 : index
      %163 = vector.load %arg6[%162, %c0_37, %c0_38] : memref<8x8x128xf32, #tpu.memory_space<vmem>>, vector<1x8x128xf32>
      %164 = vector.shape_cast %163 : vector<1x8x128xf32> to vector<8x128xf32>
      %165 = vector.shape_cast %161 : vector<8x128xf32> to vector<1x8x128xf32>
      tpu.vector_store %arg6[%162, %c0_37, %c0_38], %165 {strides = array<i32>} : memref<8x8x128xf32, #tpu.memory_space<vmem>>, vector<1x8x128xf32>,
      %c3_i32 = arith.constant 3 : i32
      %166 = arith.index_cast %c3_i32 : i32 to index
      %c0_39 = arith.constant 0 : index
      %c0_40 = arith.constant 0 : index
      %167 = vector.load %arg3[%166, %c0_39, %c0_40] : memref<8x8x512xbf16, #tpu.memory_space<vmem>>, vector<1x8x512xbf16>
      %168 = vector.shape_cast %167 : vector<1x8x512xbf16> to vector<8x512xbf16>
      %169 = arith.extf %168 : vector<8x512xbf16> to vector<8x512xf32>
      %170 = arith.truncf %157 : vector<8x128xf32> to vector<8x128xbf16>
      %cst_41 = arith.constant dense<0.000000e+00> : vector<8x512xf32>
      %171 = tpu.matmul %170, %15, %cst_41 {dimension_numbers = #tpu.dot_dimension_numbers<[1], [0], [0], [1], [0, 0, 1, 1], [], []>} : vector<8x128xbf16>, vector<128x512xbf16>, vector<8x512xf32> -> vector<8x512xf32>
      %172 = arith.addf %169, %171 : vector<8x512xf32>
      %173 = vector.extract_strided_slice %172 {offsets = [0, 0], sizes = [8, 128], strides = [1, 1]} : vector<8x512xf32> to vector<8x128xf32>
      %174 = arith.negf %173 : vector<8x128xf32>
      %175 = math.exp %174 : vector<8x128xf32>
      %cst_42 = arith.constant 1.000000e+00 : f32
      %176 = vector.broadcast %cst_42 : f32 to vector<8x128xf32>
      %177 = arith.addf %176, %175 : vector<8x128xf32>
      %178 = arith.divf %176, %177 : vector<8x128xf32>
      %179 = vector.extract_strided_slice %172 {offsets = [0, 128], sizes = [8, 128], strides = [1, 1]} : vector<8x512xf32> to vector<8x128xf32>
      %180 = arith.negf %179 : vector<8x128xf32>
      %181 = math.exp %180 : vector<8x128xf32>
      %cst_43 = arith.constant 1.000000e+00 : f32
      %182 = vector.broadcast %cst_43 : f32 to vector<8x128xf32>
      %183 = arith.addf %182, %181 : vector<8x128xf32>
      %184 = arith.divf %182, %183 : vector<8x128xf32>
      %185 = vector.extract_strided_slice %172 {offsets = [0, 256], sizes = [8, 128], strides = [1, 1]} : vector<8x512xf32> to vector<8x128xf32>
      %186 = math.tanh %185 : vector<8x128xf32>
      %187 = vector.extract_strided_slice %172 {offsets = [0, 384], sizes = [8, 128], strides = [1, 1]} : vector<8x512xf32> to vector<8x128xf32>
      %188 = arith.negf %187 : vector<8x128xf32>
      %189 = math.exp %188 : vector<8x128xf32>
      %cst_44 = arith.constant 1.000000e+00 : f32
      %190 = vector.broadcast %cst_44 : f32 to vector<8x128xf32>
      %191 = arith.addf %190, %189 : vector<8x128xf32>
      %192 = arith.divf %190, %191 : vector<8x128xf32>
      %193 = arith.mulf %184, %154 : vector<8x128xf32>
      %194 = arith.mulf %178, %186 : vector<8x128xf32>
      %195 = arith.addf %193, %194 : vector<8x128xf32>
      %196 = math.tanh %195 : vector<8x128xf32>
      %197 = arith.mulf %192, %196 : vector<8x128xf32>
      %198 = arith.addi %3, %c3_i32 : i32
      %199 = vector.broadcast %198 : i32 to vector<8x1xi32>
      %200 = arith.cmpi sgt, %16, %199 : vector<8x1xi32>
      %201 = vector.shape_cast %200 : vector<8x1xi1> to vector<8x1xi1>
      %202 = vector.broadcast %201 : vector<8x1xi1> to vector<8x128xi1>
      %203 = arith.select %202, %195, %154 : vector<8x128xi1>, vector<8x128xf32>
      %204 = vector.shape_cast %200 : vector<8x1xi1> to vector<8x1xi1>
      %205 = vector.broadcast %204 : vector<8x1xi1> to vector<8x128xi1>
      %206 = arith.select %205, %197, %157 : vector<8x128xi1>, vector<8x128xf32>
      %cst_45 = arith.constant 0.000000e+00 : f32
      %207 = vector.shape_cast %200 : vector<8x1xi1> to vector<8x1xi1>
      %208 = vector.broadcast %207 : vector<8x1xi1> to vector<8x128xi1>
      %209 = vector.broadcast %cst_45 : f32 to vector<8x128xf32>
      %210 = arith.select %208, %197, %209 : vector<8x128xi1>, vector<8x128xf32>
      %211 = arith.index_cast %c3_i32 : i32 to index
      %c0_46 = arith.constant 0 : index
      %c0_47 = arith.constant 0 : index
      %212 = vector.load %arg6[%211, %c0_46, %c0_47] : memref<8x8x128xf32, #tpu.memory_space<vmem>>, vector<1x8x128xf32>
      %213 = vector.shape_cast %212 : vector<1x8x128xf32> to vector<8x128xf32>
      %214 = vector.shape_cast %210 : vector<8x128xf32> to vector<1x8x128xf32>
      tpu.vector_store %arg6[%211, %c0_46, %c0_47], %214 {strides = array<i32>} : memref<8x8x128xf32, #tpu.memory_space<vmem>>, vector<1x8x128xf32>,
      %c4_i32 = arith.constant 4 : i32
      %215 = arith.index_cast %c4_i32 : i32 to index
      %c0_48 = arith.constant 0 : index
      %c0_49 = arith.constant 0 : index
      %216 = vector.load %arg3[%215, %c0_48, %c0_49] : memref<8x8x512xbf16, #tpu.memory_space<vmem>>, vector<1x8x512xbf16>
      %217 = vector.shape_cast %216 : vector<1x8x512xbf16> to vector<8x512xbf16>
      %218 = arith.extf %217 : vector<8x512xbf16> to vector<8x512xf32>
      %219 = arith.truncf %206 : vector<8x128xf32> to vector<8x128xbf16>
      %cst_50 = arith.constant dense<0.000000e+00> : vector<8x512xf32>
      %220 = tpu.matmul %219, %15, %cst_50 {dimension_numbers = #tpu.dot_dimension_numbers<[1], [0], [0], [1], [0, 0, 1, 1], [], []>} : vector<8x128xbf16>, vector<128x512xbf16>, vector<8x512xf32> -> vector<8x512xf32>
      %221 = arith.addf %218, %220 : vector<8x512xf32>
      %222 = vector.extract_strided_slice %221 {offsets = [0, 0], sizes = [8, 128], strides = [1, 1]} : vector<8x512xf32> to vector<8x128xf32>
      %223 = arith.negf %222 : vector<8x128xf32>
      %224 = math.exp %223 : vector<8x128xf32>
      %cst_51 = arith.constant 1.000000e+00 : f32
      %225 = vector.broadcast %cst_51 : f32 to vector<8x128xf32>
      %226 = arith.addf %225, %224 : vector<8x128xf32>
      %227 = arith.divf %225, %226 : vector<8x128xf32>
      %228 = vector.extract_strided_slice %221 {offsets = [0, 128], sizes = [8, 128], strides = [1, 1]} : vector<8x512xf32> to vector<8x128xf32>
      %229 = arith.negf %228 : vector<8x128xf32>
      %230 = math.exp %229 : vector<8x128xf32>
      %cst_52 = arith.constant 1.000000e+00 : f32
      %231 = vector.broadcast %cst_52 : f32 to vector<8x128xf32>
      %232 = arith.addf %231, %230 : vector<8x128xf32>
      %233 = arith.divf %231, %232 : vector<8x128xf32>
      %234 = vector.extract_strided_slice %221 {offsets = [0, 256], sizes = [8, 128], strides = [1, 1]} : vector<8x512xf32> to vector<8x128xf32>
      %235 = math.tanh %234 : vector<8x128xf32>
      %236 = vector.extract_strided_slice %221 {offsets = [0, 384], sizes = [8, 128], strides = [1, 1]} : vector<8x512xf32> to vector<8x128xf32>
      %237 = arith.negf %236 : vector<8x128xf32>
      %238 = math.exp %237 : vector<8x128xf32>
      %cst_53 = arith.constant 1.000000e+00 : f32
      %239 = vector.broadcast %cst_53 : f32 to vector<8x128xf32>
      %240 = arith.addf %239, %238 : vector<8x128xf32>
      %241 = arith.divf %239, %240 : vector<8x128xf32>
      %242 = arith.mulf %233, %203 : vector<8x128xf32>
      %243 = arith.mulf %227, %235 : vector<8x128xf32>
      %244 = arith.addf %242, %243 : vector<8x128xf32>
      %245 = math.tanh %244 : vector<8x128xf32>
      %246 = arith.mulf %241, %245 : vector<8x128xf32>
      %247 = arith.addi %3, %c4_i32 : i32
      %248 = vector.broadcast %247 : i32 to vector<8x1xi32>
      %249 = arith.cmpi sgt, %16, %248 : vector<8x1xi32>
      %250 = vector.shape_cast %249 : vector<8x1xi1> to vector<8x1xi1>
      %251 = vector.broadcast %250 : vector<8x1xi1> to vector<8x128xi1>
      %252 = arith.select %251, %244, %203 : vector<8x128xi1>, vector<8x128xf32>
      %253 = vector.shape_cast %249 : vector<8x1xi1> to vector<8x1xi1>
      %254 = vector.broadcast %253 : vector<8x1xi1> to vector<8x128xi1>
      %255 = arith.select %254, %246, %206 : vector<8x128xi1>, vector<8x128xf32>
      %cst_54 = arith.constant 0.000000e+00 : f32
      %256 = vector.shape_cast %249 : vector<8x1xi1> to vector<8x1xi1>
      %257 = vector.broadcast %256 : vector<8x1xi1> to vector<8x128xi1>
      %258 = vector.broadcast %cst_54 : f32 to vector<8x128xf32>
      %259 = arith.select %257, %246, %258 : vector<8x128xi1>, vector<8x128xf32>
      %260 = arith.index_cast %c4_i32 : i32 to index
      %c0_55 = arith.constant 0 : index
      %c0_56 = arith.constant 0 : index
      %261 = vector.load %arg6[%260, %c0_55, %c0_56] : memref<8x8x128xf32, #tpu.memory_space<vmem>>, vector<1x8x128xf32>
      %262 = vector.shape_cast %261 : vector<1x8x128xf32> to vector<8x128xf32>
      %263 = vector.shape_cast %259 : vector<8x128xf32> to vector<1x8x128xf32>
      tpu.vector_store %arg6[%260, %c0_55, %c0_56], %263 {strides = array<i32>} : memref<8x8x128xf32, #tpu.memory_space<vmem>>, vector<1x8x128xf32>,
      %c5_i32 = arith.constant 5 : i32
      %264 = arith.index_cast %c5_i32 : i32 to index
      %c0_57 = arith.constant 0 : index
      %c0_58 = arith.constant 0 : index
      %265 = vector.load %arg3[%264, %c0_57, %c0_58] : memref<8x8x512xbf16, #tpu.memory_space<vmem>>, vector<1x8x512xbf16>
      %266 = vector.shape_cast %265 : vector<1x8x512xbf16> to vector<8x512xbf16>
      %267 = arith.extf %266 : vector<8x512xbf16> to vector<8x512xf32>
      %268 = arith.truncf %255 : vector<8x128xf32> to vector<8x128xbf16>
      %cst_59 = arith.constant dense<0.000000e+00> : vector<8x512xf32>
      %269 = tpu.matmul %268, %15, %cst_59 {dimension_numbers = #tpu.dot_dimension_numbers<[1], [0], [0], [1], [0, 0, 1, 1], [], []>} : vector<8x128xbf16>, vector<128x512xbf16>, vector<8x512xf32> -> vector<8x512xf32>
      %270 = arith.addf %267, %269 : vector<8x512xf32>
      %271 = vector.extract_strided_slice %270 {offsets = [0, 0], sizes = [8, 128], strides = [1, 1]} : vector<8x512xf32> to vector<8x128xf32>
      %272 = arith.negf %271 : vector<8x128xf32>
      %273 = math.exp %272 : vector<8x128xf32>
      %cst_60 = arith.constant 1.000000e+00 : f32
      %274 = vector.broadcast %cst_60 : f32 to vector<8x128xf32>
      %275 = arith.addf %274, %273 : vector<8x128xf32>
      %276 = arith.divf %274, %275 : vector<8x128xf32>
      %277 = vector.extract_strided_slice %270 {offsets = [0, 128], sizes = [8, 128], strides = [1, 1]} : vector<8x512xf32> to vector<8x128xf32>
      %278 = arith.negf %277 : vector<8x128xf32>
      %279 = math.exp %278 : vector<8x128xf32>
      %cst_61 = arith.constant 1.000000e+00 : f32
      %280 = vector.broadcast %cst_61 : f32 to vector<8x128xf32>
      %281 = arith.addf %280, %279 : vector<8x128xf32>
      %282 = arith.divf %280, %281 : vector<8x128xf32>
      %283 = vector.extract_strided_slice %270 {offsets = [0, 256], sizes = [8, 128], strides = [1, 1]} : vector<8x512xf32> to vector<8x128xf32>
      %284 = math.tanh %283 : vector<8x128xf32>
      %285 = vector.extract_strided_slice %270 {offsets = [0, 384], sizes = [8, 128], strides = [1, 1]} : vector<8x512xf32> to vector<8x128xf32>
      %286 = arith.negf %285 : vector<8x128xf32>
      %287 = math.exp %286 : vector<8x128xf32>
      %cst_62 = arith.constant 1.000000e+00 : f32
      %288 = vector.broadcast %cst_62 : f32 to vector<8x128xf32>
      %289 = arith.addf %288, %287 : vector<8x128xf32>
      %290 = arith.divf %288, %289 : vector<8x128xf32>
      %291 = arith.mulf %282, %252 : vector<8x128xf32>
      %292 = arith.mulf %276, %284 : vector<8x128xf32>
      %293 = arith.addf %291, %292 : vector<8x128xf32>
      %294 = math.tanh %293 : vector<8x128xf32>
      %295 = arith.mulf %290, %294 : vector<8x128xf32>
      %296 = arith.addi %3, %c5_i32 : i32
      %297 = vector.broadcast %296 : i32 to vector<8x1xi32>
      %298 = arith.cmpi sgt, %16, %297 : vector<8x1xi32>
      %299 = vector.shape_cast %298 : vector<8x1xi1> to vector<8x1xi1>
      %300 = vector.broadcast %299 : vector<8x1xi1> to vector<8x128xi1>
      %301 = arith.select %300, %293, %252 : vector<8x128xi1>, vector<8x128xf32>
      %302 = vector.shape_cast %298 : vector<8x1xi1> to vector<8x1xi1>
      %303 = vector.broadcast %302 : vector<8x1xi1> to vector<8x128xi1>
      %304 = arith.select %303, %295, %255 : vector<8x128xi1>, vector<8x128xf32>
      %cst_63 = arith.constant 0.000000e+00 : f32
      %305 = vector.shape_cast %298 : vector<8x1xi1> to vector<8x1xi1>
      %306 = vector.broadcast %305 : vector<8x1xi1> to vector<8x128xi1>
      %307 = vector.broadcast %cst_63 : f32 to vector<8x128xf32>
      %308 = arith.select %306, %295, %307 : vector<8x128xi1>, vector<8x128xf32>
      %309 = arith.index_cast %c5_i32 : i32 to index
      %c0_64 = arith.constant 0 : index
      %c0_65 = arith.constant 0 : index
      %310 = vector.load %arg6[%309, %c0_64, %c0_65] : memref<8x8x128xf32, #tpu.memory_space<vmem>>, vector<1x8x128xf32>
      %311 = vector.shape_cast %310 : vector<1x8x128xf32> to vector<8x128xf32>
      %312 = vector.shape_cast %308 : vector<8x128xf32> to vector<1x8x128xf32>
      tpu.vector_store %arg6[%309, %c0_64, %c0_65], %312 {strides = array<i32>} : memref<8x8x128xf32, #tpu.memory_space<vmem>>, vector<1x8x128xf32>,
      %c6_i32 = arith.constant 6 : i32
      %313 = arith.index_cast %c6_i32 : i32 to index
      %c0_66 = arith.constant 0 : index
      %c0_67 = arith.constant 0 : index
      %314 = vector.load %arg3[%313, %c0_66, %c0_67] : memref<8x8x512xbf16, #tpu.memory_space<vmem>>, vector<1x8x512xbf16>
      %315 = vector.shape_cast %314 : vector<1x8x512xbf16> to vector<8x512xbf16>
      %316 = arith.extf %315 : vector<8x512xbf16> to vector<8x512xf32>
      %317 = arith.truncf %304 : vector<8x128xf32> to vector<8x128xbf16>
      %cst_68 = arith.constant dense<0.000000e+00> : vector<8x512xf32>
      %318 = tpu.matmul %317, %15, %cst_68 {dimension_numbers = #tpu.dot_dimension_numbers<[1], [0], [0], [1], [0, 0, 1, 1], [], []>} : vector<8x128xbf16>, vector<128x512xbf16>, vector<8x512xf32> -> vector<8x512xf32>
      %319 = arith.addf %316, %318 : vector<8x512xf32>
      %320 = vector.extract_strided_slice %319 {offsets = [0, 0], sizes = [8, 128], strides = [1, 1]} : vector<8x512xf32> to vector<8x128xf32>
      %321 = arith.negf %320 : vector<8x128xf32>
      %322 = math.exp %321 : vector<8x128xf32>
      %cst_69 = arith.constant 1.000000e+00 : f32
      %323 = vector.broadcast %cst_69 : f32 to vector<8x128xf32>
      %324 = arith.addf %323, %322 : vector<8x128xf32>
      %325 = arith.divf %323, %324 : vector<8x128xf32>
      %326 = vector.extract_strided_slice %319 {offsets = [0, 128], sizes = [8, 128], strides = [1, 1]} : vector<8x512xf32> to vector<8x128xf32>
      %327 = arith.negf %326 : vector<8x128xf32>
      %328 = math.exp %327 : vector<8x128xf32>
      %cst_70 = arith.constant 1.000000e+00 : f32
      %329 = vector.broadcast %cst_70 : f32 to vector<8x128xf32>
      %330 = arith.addf %329, %328 : vector<8x128xf32>
      %331 = arith.divf %329, %330 : vector<8x128xf32>
      %332 = vector.extract_strided_slice %319 {offsets = [0, 256], sizes = [8, 128], strides = [1, 1]} : vector<8x512xf32> to vector<8x128xf32>
      %333 = math.tanh %332 : vector<8x128xf32>
      %334 = vector.extract_strided_slice %319 {offsets = [0, 384], sizes = [8, 128], strides = [1, 1]} : vector<8x512xf32> to vector<8x128xf32>
      %335 = arith.negf %334 : vector<8x128xf32>
      %336 = math.exp %335 : vector<8x128xf32>
      %cst_71 = arith.constant 1.000000e+00 : f32
      %337 = vector.broadcast %cst_71 : f32 to vector<8x128xf32>
      %338 = arith.addf %337, %336 : vector<8x128xf32>
      %339 = arith.divf %337, %338 : vector<8x128xf32>
      %340 = arith.mulf %331, %301 : vector<8x128xf32>
      %341 = arith.mulf %325, %333 : vector<8x128xf32>
      %342 = arith.addf %340, %341 : vector<8x128xf32>
      %343 = math.tanh %342 : vector<8x128xf32>
      %344 = arith.mulf %339, %343 : vector<8x128xf32>
      %345 = arith.addi %3, %c6_i32 : i32
      %346 = vector.broadcast %345 : i32 to vector<8x1xi32>
      %347 = arith.cmpi sgt, %16, %346 : vector<8x1xi32>
      %348 = vector.shape_cast %347 : vector<8x1xi1> to vector<8x1xi1>
      %349 = vector.broadcast %348 : vector<8x1xi1> to vector<8x128xi1>
      %350 = arith.select %349, %342, %301 : vector<8x128xi1>, vector<8x128xf32>
      %351 = vector.shape_cast %347 : vector<8x1xi1> to vector<8x1xi1>
      %352 = vector.broadcast %351 : vector<8x1xi1> to vector<8x128xi1>
      %353 = arith.select %352, %344, %304 : vector<8x128xi1>, vector<8x128xf32>
      %cst_72 = arith.constant 0.000000e+00 : f32
      %354 = vector.shape_cast %347 : vector<8x1xi1> to vector<8x1xi1>
      %355 = vector.broadcast %354 : vector<8x1xi1> to vector<8x128xi1>
      %356 = vector.broadcast %cst_72 : f32 to vector<8x128xf32>
      %357 = arith.select %355, %344, %356 : vector<8x128xi1>, vector<8x128xf32>
      %358 = arith.index_cast %c6_i32 : i32 to index
      %c0_73 = arith.constant 0 : index
      %c0_74 = arith.constant 0 : index
      %359 = vector.load %arg6[%358, %c0_73, %c0_74] : memref<8x8x128xf32, #tpu.memory_space<vmem>>, vector<1x8x128xf32>
      %360 = vector.shape_cast %359 : vector<1x8x128xf32> to vector<8x128xf32>
      %361 = vector.shape_cast %357 : vector<8x128xf32> to vector<1x8x128xf32>
      tpu.vector_store %arg6[%358, %c0_73, %c0_74], %361 {strides = array<i32>} : memref<8x8x128xf32, #tpu.memory_space<vmem>>, vector<1x8x128xf32>,
      %c7_i32 = arith.constant 7 : i32
      %362 = arith.index_cast %c7_i32 : i32 to index
      %c0_75 = arith.constant 0 : index
      %c0_76 = arith.constant 0 : index
      %363 = vector.load %arg3[%362, %c0_75, %c0_76] : memref<8x8x512xbf16, #tpu.memory_space<vmem>>, vector<1x8x512xbf16>
      %364 = vector.shape_cast %363 : vector<1x8x512xbf16> to vector<8x512xbf16>
      %365 = arith.extf %364 : vector<8x512xbf16> to vector<8x512xf32>
      %366 = arith.truncf %353 : vector<8x128xf32> to vector<8x128xbf16>
      %cst_77 = arith.constant dense<0.000000e+00> : vector<8x512xf32>
      %367 = tpu.matmul %366, %15, %cst_77 {dimension_numbers = #tpu.dot_dimension_numbers<[1], [0], [0], [1], [0, 0, 1, 1], [], []>} : vector<8x128xbf16>, vector<128x512xbf16>, vector<8x512xf32> -> vector<8x512xf32>
      %368 = arith.addf %365, %367 : vector<8x512xf32>
      %369 = vector.extract_strided_slice %368 {offsets = [0, 0], sizes = [8, 128], strides = [1, 1]} : vector<8x512xf32> to vector<8x128xf32>
      %370 = arith.negf %369 : vector<8x128xf32>
      %371 = math.exp %370 : vector<8x128xf32>
      %cst_78 = arith.constant 1.000000e+00 : f32
      %372 = vector.broadcast %cst_78 : f32 to vector<8x128xf32>
      %373 = arith.addf %372, %371 : vector<8x128xf32>
      %374 = arith.divf %372, %373 : vector<8x128xf32>
      %375 = vector.extract_strided_slice %368 {offsets = [0, 128], sizes = [8, 128], strides = [1, 1]} : vector<8x512xf32> to vector<8x128xf32>
      %376 = arith.negf %375 : vector<8x128xf32>
      %377 = math.exp %376 : vector<8x128xf32>
      %cst_79 = arith.constant 1.000000e+00 : f32
      %378 = vector.broadcast %cst_79 : f32 to vector<8x128xf32>
      %379 = arith.addf %378, %377 : vector<8x128xf32>
      %380 = arith.divf %378, %379 : vector<8x128xf32>
      %381 = vector.extract_strided_slice %368 {offsets = [0, 256], sizes = [8, 128], strides = [1, 1]} : vector<8x512xf32> to vector<8x128xf32>
      %382 = math.tanh %381 : vector<8x128xf32>
      %383 = vector.extract_strided_slice %368 {offsets = [0, 384], sizes = [8, 128], strides = [1, 1]} : vector<8x512xf32> to vector<8x128xf32>
      %384 = arith.negf %383 : vector<8x128xf32>
      %385 = math.exp %384 : vector<8x128xf32>
      %cst_80 = arith.constant 1.000000e+00 : f32
      %386 = vector.broadcast %cst_80 : f32 to vector<8x128xf32>
      %387 = arith.addf %386, %385 : vector<8x128xf32>
      %388 = arith.divf %386, %387 : vector<8x128xf32>
      %389 = arith.mulf %380, %350 : vector<8x128xf32>
      %390 = arith.mulf %374, %382 : vector<8x128xf32>
      %391 = arith.addf %389, %390 : vector<8x128xf32>
      %392 = math.tanh %391 : vector<8x128xf32>
      %393 = arith.mulf %388, %392 : vector<8x128xf32>
      %394 = arith.addi %3, %c7_i32 : i32
      %395 = vector.broadcast %394 : i32 to vector<8x1xi32>
      %396 = arith.cmpi sgt, %16, %395 : vector<8x1xi32>
      %397 = vector.shape_cast %396 : vector<8x1xi1> to vector<8x1xi1>
      %398 = vector.broadcast %397 : vector<8x1xi1> to vector<8x128xi1>
      %399 = arith.select %398, %391, %350 : vector<8x128xi1>, vector<8x128xf32>
      %400 = vector.shape_cast %396 : vector<8x1xi1> to vector<8x1xi1>
      %401 = vector.broadcast %400 : vector<8x1xi1> to vector<8x128xi1>
      %402 = arith.select %401, %393, %353 : vector<8x128xi1>, vector<8x128xf32>
      %cst_81 = arith.constant 0.000000e+00 : f32
      %403 = vector.shape_cast %396 : vector<8x1xi1> to vector<8x1xi1>
      %404 = vector.broadcast %403 : vector<8x1xi1> to vector<8x128xi1>
      %405 = vector.broadcast %cst_81 : f32 to vector<8x128xf32>
      %406 = arith.select %404, %393, %405 : vector<8x128xi1>, vector<8x128xf32>
      %407 = arith.index_cast %c7_i32 : i32 to index
      %c0_82 = arith.constant 0 : index
      %c0_83 = arith.constant 0 : index
      %408 = vector.load %arg6[%407, %c0_82, %c0_83] : memref<8x8x128xf32, #tpu.memory_space<vmem>>, vector<1x8x128xf32>
      %409 = vector.shape_cast %408 : vector<1x8x128xf32> to vector<8x128xf32>
      %410 = vector.shape_cast %406 : vector<8x128xf32> to vector<1x8x128xf32>
      tpu.vector_store %arg6[%407, %c0_82, %c0_83], %410 {strides = array<i32>} : memref<8x8x128xf32, #tpu.memory_space<vmem>>, vector<1x8x128xf32>,
      %c8_i32_84 = arith.constant 8 : i32
      %c0_85 = arith.constant 0 : index
      %c0_86 = arith.constant 0 : index
      %411 = vector.load %arg11[%c0_85, %c0_86] : memref<8x128xf32, #tpu.memory_space<vmem>>, vector<8x128xf32>
      tpu.vector_store %arg11[%c0_85, %c0_86], %402 {strides = array<i32>} : memref<8x128xf32, #tpu.memory_space<vmem>>, vector<8x128xf32>,
      %c0_87 = arith.constant 0 : index
      %c0_88 = arith.constant 0 : index
      %412 = vector.load %arg12[%c0_87, %c0_88] : memref<8x128xf32, #tpu.memory_space<vmem>>, vector<8x128xf32>
      tpu.vector_store %arg12[%c0_87, %c0_88], %399 {strides = array<i32>} : memref<8x128xf32, #tpu.memory_space<vmem>>, vector<8x128xf32>,
    } else {
    }
    %true = arith.constant true
    %9 = arith.xori %6, %true : i1
    %10 = arith.extui %9 : i1 to i32
    %c0_i32_2 = arith.constant 0 : i32
    %11 = arith.cmpi ne, %10, %c0_i32_2 : i32
    scf.if %11 {
      %cst = arith.constant 0.000000e+00 : f32
      %15 = vector.broadcast %cst : f32 to vector<8x8x128xf32>
      %c0 = arith.constant 0 : index
      %c0_5 = arith.constant 0 : index
      %c0_6 = arith.constant 0 : index
      %16 = vector.load %arg6[%c0, %c0_5, %c0_6] : memref<8x8x128xf32, #tpu.memory_space<vmem>>, vector<8x8x128xf32>
      tpu.vector_store %arg6[%c0, %c0_5, %c0_6], %15 {strides = array<i32>} : memref<8x8x128xf32, #tpu.memory_space<vmem>>, vector<8x8x128xf32>,
    } else {
    }
    %c0_i32_3 = arith.constant 0 : i32
    %12 = arith.cmpi eq, %arg1, %c0_i32_3 : i32
    %13 = arith.extui %12 : i1 to i32
    %c0_i32_4 = arith.constant 0 : i32
    %14 = arith.cmpi ne, %13, %c0_i32_4 : i32
    scf.if %14 {
      %c0 = arith.constant 0 : index
      %c0_5 = arith.constant 0 : index
      %15 = vector.load %arg11[%c0, %c0_5] : memref<8x128xf32, #tpu.memory_space<vmem>>, vector<8x128xf32>
      %c0_6 = arith.constant 0 : index
      %c0_7 = arith.constant 0 : index
      %16 = vector.load %arg7[%c0_6, %c0_7] : memref<8x128xf32, #tpu.memory_space<vmem>>, vector<8x128xf32>
      tpu.vector_store %arg7[%c0_6, %c0_7], %15 {strides = array<i32>} : memref<8x128xf32, #tpu.memory_space<vmem>>, vector<8x128xf32>,
      %c0_8 = arith.constant 0 : index
      %c0_9 = arith.constant 0 : index
      %17 = vector.load %arg12[%c0_8, %c0_9] : memref<8x128xf32, #tpu.memory_space<vmem>>, vector<8x128xf32>
      %c0_10 = arith.constant 0 : index
      %c0_11 = arith.constant 0 : index
      %18 = vector.load %arg8[%c0_10, %c0_11] : memref<8x128xf32, #tpu.memory_space<vmem>>, vector<8x128xf32>
      tpu.vector_store %arg8[%c0_10, %c0_11], %17 {strides = array<i32>} : memref<8x128xf32, #tpu.memory_space<vmem>>, vector<8x128xf32>,
    } else {
    }
    return
  }
  func.func @transform_0(%arg0: i32, %arg1: i32, %arg2: memref<1xi32, #tpu.memory_space<smem>>) -> (i32, i32, i32) {
    %c0_i32 = arith.constant 0 : i32
    %c0_i32_0 = arith.constant 0 : i32
    return %arg1, %arg0, %c0_i32 : i32, i32, i32
  }
  func.func @transform_1(%arg0: i32, %arg1: i32, %arg2: memref<1xi32, #tpu.memory_space<smem>>) -> (i32, i32) {
    %c0_i32 = arith.constant 0 : i32
    %c0_i32_0 = arith.constant 0 : i32
    return %arg0, %c0_i32 : i32, i32
  }
  func.func @transform_3(%arg0: i32, %arg1: i32, %arg2: memref<1xi32, #tpu.memory_space<smem>>) -> (i32, i32, i32) {
    %c0_i32 = arith.constant 0 : i32
    %c0_i32_0 = arith.constant 0 : i32
    return %arg1, %arg0, %c0_i32 : i32, i32, i32
  }
  func.func @transform_4(%arg0: i32, %arg1: i32, %arg2: memref<1xi32, #tpu.memory_space<smem>>) -> (i32, i32) {
    %c0_i32 = arith.constant 0 : i32
    %c0_i32_0 = arith.constant 0 : i32
    return %arg0, %c0_i32 : i32, i32
  }
  func.func @transform_5(%arg0: i32, %arg1: i32, %arg2: memref<1xi32, #tpu.memory_space<smem>>) -> (i32, i32) {
    %c0_i32 = arith.constant 0 : i32
    %c0_i32_0 = arith.constant 0 : i32
    return %arg0, %c0_i32 : i32, i32
  }
}

</mosaic_0001>

<llo_original>
// kernel: tpu_custom_call.1
$region0: #{tpu_custom_call.1}
  #allocation0 [shape = 'u32[]', space=smem, size = 0x4, offset = 0x4, fixed_abs, tag = 'smem constant byte address 0x4 - core index']
  #allocation1 [shape = 'u32[144,128]{1,0:T(1,128)}', space=vmem, size = 0x12000, scoped, tag = 'internal scratch']
  #allocation2 [shape = 'bf16[128,512]{1,0:T(16,128)(2,1)}', space=vmem, size = 0x20000, scoped, tag = 'scratch operand']
  #allocation3 [shape = 's32[1]{0}', space=sflag, size = 0x4, scoped, tag = 'scratch operand']
  #allocation4 [shape = 'f32[8,128]{1,0:T(8,128)}', space=vmem, size = 0x1000, scoped, tag = 'scratch operand']
  #allocation5 [shape = 'f32[8,128]{1,0:T(8,128)}', space=vmem, size = 0x1000, scoped, tag = 'scratch operand']
  #allocation6 [shape = 's32[1]{0}', space=sflag, size = 0x4, scoped, tag = 'scoped memory for tpu_custom_call.1']
  #allocation7 [shape = 's32[1]{0:T(128)S(6)}', space=smem, size = 0x200, scoped, tag = 'prefetched SMEM operand 0']
  #allocation17 [shape = 's32[]', space=sflag, size = 0x4, offset = 0, fixed_abs, tag = 'sflag constant byte address 0x0 - dummy sync flag']
  %s0 = inlined_call_operand.<no memory space> [shape: s32[1], index: 0, kind: input, shape index: {}]
  %s1 = inlined_call_operand.hbm [shape: bf16[8,8,512], index: 1, kind: input, shape index: {}]
  %s2 = inlined_call_operand.hbm [shape: s32[8,1], index: 2, kind: input, shape index: {}]
  %s3 = inlined_call_operand.hbm [shape: bf16[128,512], index: 3, kind: input, shape index: {}]
  %s4 = inlined_call_operand.hbm [shape: f32[8,8,128], index: 4, kind: output, shape index: {0}]
  %s5 = inlined_call_operand.hbm [shape: f32[8,128], index: 5, kind: output, shape index: {1}]
  %s6 = inlined_call_operand.hbm [shape: f32[8,128], index: 6, kind: output, shape index: {2}]
  %7 = xla_tuple %s4, %s5, %s6
  %s8 = sld [smem:[#allocation0]]
  $region58: #{tpu_custom_call.1} parent=0
    _
  %s10 = ssub.s32 1, %s8
  %s11 = scalar_select 0, %s10, %s8
  %12 = sst [smem:[#allocation7]] %s0
  $region1: #{tpu_custom_call.1} parent=0
    #allocation8 [shape = 'u8[65536]{0}', space=vmem, size = 0x10000, scoped, tag = 'input window, operand 1, single buffered']
    #allocation9 [shape = 's32[1]{0}', space=sflag, size = 0x4, scoped, tag = 'scoped memory for tpu_custom_call.1']
    #allocation10 [shape = 's32[1]{0}', space=sflag, size = 0x4, scoped, tag = 'scoped memory for tpu_custom_call.1']
    #allocation11 [shape = 'u8[4096]{0}', space=vmem, size = 0x1000, scoped, tag = 'input window, operand 2, single buffered']
    #allocation12 [shape = 's32[1]{0}', space=sflag, size = 0x4, scoped, tag = 'scoped memory for tpu_custom_call.1']
    #allocation13 [shape = 'u8[32768]{0}', space=vmem, size = 0x8000, scoped, tag = 'output window, operand 0, single buffered']
    #allocation14 [shape = 'u8[4096]{0}', space=vmem, size = 0x1000, scoped, tag = 'output window, operand 1, single buffered']
    #allocation15 [shape = 's32[1]{0}', space=sflag, size = 0x4, scoped, tag = 'scoped memory for tpu_custom_call.1']
    #allocation16 [shape = 'u8[4096]{0}', space=vmem, size = 0x1000, scoped, tag = 'output window, operand 2, single buffered']
    %13 = vsyncpa [#allocation9], 0
    %14 = vsyncpa [#allocation12], 0
    %15 = vsyncpa [#allocation10], 0
    %16 = vsyncpa [#allocation15], 0
    // Predicated region
    $region2: #{tpu_custom_call.1} parent=1 // pred_check
      _
    $region3: #{tpu_custom_call.1} parent=1 // pred_check_branch
      %18 = sbr.rel (0) target = $region5
    $region4: #{tpu_custom_call.1} parent=1 // pred_region
      %s20 = ssub.s32 2048, 2048
      %21 = vsyncadd [#allocation9], %s20
      %s22 = sshll.u32 [#allocation8], 4
      %s23 = int_to_ptr.vmem [resolvable:$true] %s22
      %28 = dma.hbm_to_vmem [thread:$0]  %s1, 2048, %s23, [#allocation9], 256, 256, 16
    $region5: #{tpu_custom_call.1} parent=1 // pred_fallthru
      _
    // Predicated region
    $region6: #{tpu_custom_call.1} parent=1 // pred_check
      _
    $region7: #{tpu_custom_call.1} parent=1 // pred_check_branch
      %30 = sbr.rel (0) target = $region9
    $region8: #{tpu_custom_call.1} parent=1 // pred_region
      %s32 = ssub.s32 128, 128
      %33 = vsyncadd [#allocation12], %s32
      %s35 = sshll.u32 [#allocation11], 4
      %s36 = int_to_ptr.vmem [resolvable:$true] %s35
      %38 = dma.hbm_to_vmem [thread:$0]  %s2, 128, %s36, [#allocation12]
    $region9: #{tpu_custom_call.1} parent=1 // pred_fallthru
      _
    // Predicated region
    $region10: #{tpu_custom_call.1} parent=1 // pred_check
      _
    $region11: #{tpu_custom_call.1} parent=1 // pred_check_branch
      %40 = sbr.rel (0) target = $region13
    $region12: #{tpu_custom_call.1} parent=1 // pred_region
      %41 = dma.done [#allocation9], 2048
    $region13: #{tpu_custom_call.1} parent=1 // pred_fallthru
      _
    // Predicated region
    $region14: #{tpu_custom_call.1} parent=1 // pred_check
      _
    $region15: #{tpu_custom_call.1} parent=1 // pred_check_branch
      %43 = sbr.rel (0) target = $region17
    $region16: #{tpu_custom_call.1} parent=1 // pred_region
      %44 = dma.done [#allocation12], 128
    $region17: #{tpu_custom_call.1} parent=1 // pred_fallthru
      _
    %p46 = scmp.eq.s32.totalorder 0, 0
    // Predicated region
    $region18: #{tpu_custom_call.1} parent=1 // pred_check
      %p47 = pneg %p46
    $region19: #{tpu_custom_call.1} parent=1 // pred_check_branch
      %49 = sbr.rel (%p47) target = $region21
    $region20: #{tpu_custom_call.1} parent=1 // pred_region
      #allocation18 [shape = 'u32[9]{0}', space=smem, size = 0x24, scoped, tag = 'DMA stride descriptor']
      %50 = vst [vmem:[#allocation4] sm:$0xff] 0.0
      %51 = vst [vmem:[#allocation5] sm:$0xff] 0.0
      %s53 = sshll.u32 1, 14
      %s54 = sxor.u32 4294967295, %s53
      %s56 = sld [smem:[#allocation0]]
      %s57 = sadd.s32 2, %s56
      %s59 = sshll.u32 7, 26
      %s60 = sxor.u32 4294967295, %s59
      %s61 = sand.u32 0, %s60
      %s62 = sshll.u32 %s57, 26
      %s63 = sor.u32 %s61, %s62
      %s64 = sshll.u32 [#allocation2], 4
      %s65 = int_to_ptr.vmem [resolvable:$true] %s64
      %68 = sst [smem:[#allocation18]] 512
      %s69 = scalar_lea.smem [#allocation18], 1
      %70 = sst [smem:[%s69]] 512
      %s71 = scalar_lea.smem [#allocation18], 2
      %72 = sst [smem:[%s71]] 4
      %s73 = scalar_lea.smem [#allocation18], 3
      %74 = sst [smem:[%s73]] 64
      %s75 = scalar_lea.smem [#allocation18], 4
      %76 = sst [smem:[%s75]] 128
      %s77 = scalar_lea.smem [#allocation18], 5
      %78 = sst [smem:[%s77]] 2
      %s79 = scalar_lea.smem [#allocation18], 6
      %80 = sst [smem:[%s79]] 256
      %s81 = scalar_lea.smem [#allocation18], 7
      %82 = sst [smem:[%s81]] 64
      %s83 = scalar_lea.smem [#allocation18], 8
      %84 = sst [smem:[%s83]] 4
      %86 = dma.general %s3, 4096, %s65, [#allocation3], [#allocation17], [#allocation18], %s63, 0
      %s87 = smul.u32 4, 16
      %s88 = smul.u32 %s87, 4
      %s89 = sshll.u32 %s88, 4
      %90 = dma.done [#allocation3], %s89
    $region21: #{tpu_custom_call.1} parent=1 // pred_fallthru
      _
    %s91 = smul.u32 0, 8
    %s92 = sld [smem:[#allocation7]]
    %p93 = scmp.lt.s32.totalorder %s91, %s92
    // Predicated region
    $region22: #{tpu_custom_call.1} parent=1 // pred_check
      %p94 = pneg %p93
    $region23: #{tpu_custom_call.1} parent=1 // pred_check_branch
      %96 = sbr.rel (%p94) target = $region25
    $region24: #{tpu_custom_call.1} parent=1 // pred_region
      %v97 = vld [vmem:[#allocation2] sm:$0xff]
      %v98 = vld [vmem:[#allocation2 + $0x8] sm:$0xff]
      %v99 = vld [vmem:[#allocation2 + $0x10] sm:$0xff]
      %v100 = vld [vmem:[#allocation2 + $0x18] sm:$0xff]
      %v101 = vld [vmem:[#allocation2 + $0x20] sm:$0xff]
      %v102 = vld [vmem:[#allocation2 + $0x28] sm:$0xff]
      %v103 = vld [vmem:[#allocation2 + $0x30] sm:$0xff]
      %v104 = vld [vmem:[#allocation2 + $0x38] sm:$0xff]
      %v105 = vld [vmem:[#allocation2 + $0x40] sm:$0xff]
      %v106 = vld [vmem:[#allocation2 + $0x48] sm:$0xff]
      %v107 = vld [vmem:[#allocation2 + $0x50] sm:$0xff]
      %v108 = vld [vmem:[#allocation2 + $0x58] sm:$0xff]
      %v109 = vld [vmem:[#allocation2 + $0x60] sm:$0xff]
      %v110 = vld [vmem:[#allocation2 + $0x68] sm:$0xff]
      %v111 = vld [vmem:[#allocation2 + $0x70] sm:$0xff]
      %v112 = vld [vmem:[#allocation2 + $0x78] sm:$0xff]
      %v113 = vld [vmem:[#allocation2 + $0x80] sm:$0xff]
      %v114 = vld [vmem:[#allocation2 + $0x88] sm:$0xff]
      %v115 = vld [vmem:[#allocation2 + $0x90] sm:$0xff]
      %v116 = vld [vmem:[#allocation2 + $0x98] sm:$0xff]
      %v117 = vld [vmem:[#allocation2 + $0xa0] sm:$0xff]
      %v118 = vld [vmem:[#allocation2 + $0xa8] sm:$0xff]
      %v119 = vld [vmem:[#allocation2 + $0xb0] sm:$0xff]
      %v120 = vld [vmem:[#allocation2 + $0xb8] sm:$0xff]
      %v121 = vld [vmem:[#allocation2 + $0xc0] sm:$0xff]
      %v122 = vld [vmem:[#allocation2 + $0xc8] sm:$0xff]
      %v123 = vld [vmem:[#allocation2 + $0xd0] sm:$0xff]
      %v124 = vld [vmem:[#allocation2 + $0xd8] sm:$0xff]
      %v125 = vld [vmem:[#allocation2 + $0xe0] sm:$0xff]
      %v126 = vld [vmem:[#allocation2 + $0xe8] sm:$0xff]
      %v127 = vld [vmem:[#allocation2 + $0xf0] sm:$0xff]
      %v128 = vld [vmem:[#allocation2 + $0xf8] sm:$0xff]
      %v129 = vld [vmem:[#allocation11] sm:$0xff]
      %v130 = vld [vmem:[#allocation4] sm:$0xff]
      %v131 = vld [vmem:[#allocation5] sm:$0xff]
      %v132 = vld [vmem:[#allocation8] sm:$0xff]
      %v133 = vld [vmem:[#allocation8 + $0x8] sm:$0xff]
      %v134 = vunpack.c.l.bf16 %v132
      %v135 = vunpack.c.h.bf16 %v132
      %v136 = vunpack.c.l.bf16 %v133
      %v137 = vunpack.c.h.bf16 %v133
      %v138 = vpack.c.bf16 %v130, %v130
      %139 = vmatprep.subr.bf16.mxu0 %v98
      %140 = vmatpush1.bf16.msra.mxu0 %v97
      %141 = vmatprep.subr.bf16.mxu0 %v102
      %142 = vmatpush1.bf16.msra.mxu0 %v101
      %143 = vmatprep.subr.bf16.mxu0 %v106
      %144 = vmatpush1.bf16.msra.mxu0 %v105
      %145 = vmatprep.subr.bf16.mxu0 %v110
      %146 = vmatpush1.bf16.msra.mxu0 %v109
      %147 = vmatprep.subr.bf16.mxu0 %v114
      %148 = vmatpush1.bf16.msra.mxu0 %v113
      %149 = vmatprep.subr.bf16.mxu0 %v118
      %150 = vmatpush1.bf16.msra.mxu0 %v117
      %151 = vmatprep.subr.bf16.mxu0 %v122
      %152 = vmatpush1.bf16.msra.mxu0 %v121
      %153 = vmatprep.subr.bf16.mxu0 %v126
      %154 = vmatpush1.bf16.msra.mxu0 %v125
      %155 = vmatprep.subr.bf16.mxu0 0
      %156 = vmatpush1.bf16.msra.mxu0 0
      %157 = vmatprep.subr.bf16.mxu0 0
      %158 = vmatpush1.bf16.msra.mxu0 0
      %159 = vmatprep.subr.bf16.mxu0 0
      %160 = vmatpush1.bf16.msra.mxu0 0
      %161 = vmatprep.subr.bf16.mxu0 0
      %162 = vmatpush1.bf16.msra.mxu0 0
      %163 = vmatprep.subr.bf16.mxu0 0
      %164 = vmatpush1.bf16.msra.mxu0 0
      %165 = vmatprep.subr.bf16.mxu0 0
      %166 = vmatpush1.bf16.msra.mxu0 0
      %167 = vmatprep.subr.bf16.mxu0 0
      %168 = vmatpush1.bf16.msra.mxu0 0
      %169 = vmatprep.subr.bf16.mxu0 0
      %170 = vmatpush1.bf16.msra.mxu0 0
      %171 = vmatprep.mubr.bf16.mxu0 0
      %172 = vmatmul.mubr.bf16.gmra.mrb[0].mxu0 %v138
      %v173 = vpop.f32.mrb[0].mxu0
      %v174 = vadd.f32 0.0, %v173
      %v175 = vpop.f32.mrb[0].mxu0
      %v176 = vadd.f32 0.0, %v175
      %v177 = vpop.f32.mrb[0].mxu0
      %v178 = vpop.f32.mrb[0].mxu0
      %179 = vdwg.mxu0
      %180 = vmatprep.subr.bf16.mxu0 %v100
      %181 = vmatpush1.bf16.msra.mxu0 %v99
      %182 = vmatprep.subr.bf16.mxu0 %v104
      %183 = vmatpush1.bf16.msra.mxu0 %v103
      %184 = vmatprep.subr.bf16.mxu0 %v108
      %185 = vmatpush1.bf16.msra.mxu0 %v107
      %186 = vmatprep.subr.bf16.mxu0 %v112
      %187 = vmatpush1.bf16.msra.mxu0 %v111
      %188 = vmatprep.subr.bf16.mxu0 %v116
      %189 = vmatpush1.bf16.msra.mxu0 %v115
      %190 = vmatprep.subr.bf16.mxu0 %v120
      %191 = vmatpush1.bf16.msra.mxu0 %v119
      %192 = vmatprep.subr.bf16.mxu0 %v124
      %193 = vmatpush1.bf16.msra.mxu0 %v123
      %194 = vmatprep.subr.bf16.mxu0 %v128
      %195 = vmatpush1.bf16.msra.mxu0 %v127
      %196 = vmatprep.subr.bf16.mxu0 0
      %197 = vmatpush1.bf16.msra.mxu0 0
      %198 = vmatprep.subr.bf16.mxu0 0
      %199 = vmatpush1.bf16.msra.mxu0 0
      %200 = vmatprep.subr.bf16.mxu0 0
      %201 = vmatpush1.bf16.msra.mxu0 0
      %202 = vmatprep.subr.bf16.mxu0 0
      %203 = vmatpush1.bf16.msra.mxu0 0
      %204 = vmatprep.subr.bf16.mxu0 0
      %205 = vmatpush1.bf16.msra.mxu0 0
      %206 = vmatprep.subr.bf16.mxu0 0
      %207 = vmatpush1.bf16.msra.mxu0 0
      %208 = vmatprep.subr.bf16.mxu0 0
      %209 = vmatpush1.bf16.msra.mxu0 0
      %210 = vmatprep.subr.bf16.mxu0 0
      %211 = vmatpush1.bf16.msra.mxu0 0
      %212 = vmatprep.mubr.bf16.mxu0 0
      %213 = vmatmul.mubr.bf16.gmra.mrb[0].mxu0 %v138
      %v214 = vpop.f32.mrb[0].mxu0
      %v215 = vadd.f32 0.0, %v214
      %v216 = vpop.f32.mrb[0].mxu0
      %v217 = vadd.f32 0.0, %v216
      %v218 = vpop.f32.mrb[0].mxu0
      %v219 = vpop.f32.mrb[0].mxu0
      %220 = vdwg.mxu0
      %v221 = vadd.f32 %v134, %v174
      %v222 = vadd.f32 %v135, %v176
      %v223 = vadd.f32 %v136, %v215
      %v224 = vadd.f32 %v137, %v217
      %v225 = vxor.u32 %v221, 2147483648
      %v226 = vmul.f32 %v225, 1.442695
      %v227 = vpow.pop %v226
      %v228 = vadd.f32 %v227, 1.0
      %v229 = vrcp.pop %v228
      %v230 = vmul.f32 1.0, %v229
      %v231 = vxor.u32 %v222, 2147483648
      %v232 = vmul.f32 %v231, 1.442695
      %v233 = vpow.pop %v232
      %v234 = vadd.f32 %v233, 1.0
      %v235 = vrcp.pop %v234
      %v236 = vmul.f32 1.0, %v235
      %v237 = vtanh.pop %v223
      %v238 = vxor.u32 %v224, 2147483648
      %v239 = vmul.f32 %v238, 1.442695
      %v240 = vpow.pop %v239
      %v241 = vadd.f32 %v240, 1.0
      %v242 = vrcp.pop %v241
      %v243 = vmul.f32 1.0, %v242
      %v244 = vmul.f32 %v236, %v131
      %v245 = vmul.f32 %v230, %v237
      %v246 = vadd.f32 %v244, %v245
      %v247 = vtanh.pop %v246
      %v248 = vmul.f32 %v243, %v247
      %v249 = vstv %s91
      %vm250 = vcmp.gt.s32.totalorder %v129, %v249
      %v251 = vsel %vm250, 1, 0
      %252 = vset.pattern.permute.xlu0 0
      %253 = vperm.xlu0 %252, %v251
      %v254 = vpop.permute.xlu0 %253
      %vm255 = vcmp.eq.s32.totalorder %v254, 1
      %v256 = vsel %vm255, %v246, %v131
      %v257 = vsel %vm255, %v248, %v130
      %v258 = vsel %vm255, %v248, 0.0
      %259 = vst [vmem:[#allocation13] sm:$0xff] %v258
      %s260 = scalar_lea.vmem [#allocation8], 16
      %v261 = vld [vmem:[%s260] sm:$0xff]
      %v262 = vld [vmem:[%s260 + $0x8] sm:$0xff]
      %v263 = vunpack.c.l.bf16 %v261
      %v264 = vunpack.c.h.bf16 %v261
      %v265 = vunpack.c.l.bf16 %v262
      %v266 = vunpack.c.h.bf16 %v262
      %v267 = vpack.c.bf16 %v257, %v257
      %268 = vmatprep.subr.bf16.mxu0 %v98
      %269 = vmatpush1.bf16.msra.mxu0 %v97
      %270 = vmatprep.subr.bf16.mxu0 %v102
      %271 = vmatpush1.bf16.msra.mxu0 %v101
      %272 = vmatprep.subr.bf16.mxu0 %v106
      %273 = vmatpush1.bf16.msra.mxu0 %v105
      %274 = vmatprep.subr.bf16.mxu0 %v110
      %275 = vmatpush1.bf16.msra.mxu0 %v109
      %276 = vmatprep.subr.bf16.mxu0 %v114
      %277 = vmatpush1.bf16.msra.mxu0 %v113
      %278 = vmatprep.subr.bf16.mxu0 %v118
      %279 = vmatpush1.bf16.msra.mxu0 %v117
      %280 = vmatprep.subr.bf16.mxu0 %v122
      %281 = vmatpush1.bf16.msra.mxu0 %v121
      %282 = vmatprep.subr.bf16.mxu0 %v126
      %283 = vmatpush1.bf16.msra.mxu0 %v125
      %284 = vmatprep.subr.bf16.mxu0 0
      %285 = vmatpush1.bf16.msra.mxu0 0
      %286 = vmatprep.subr.bf16.mxu0 0
      %287 = vmatpush1.bf16.msra.mxu0 0
      %288 = vmatprep.subr.bf16.mxu0 0
      %289 = vmatpush1.bf16.msra.mxu0 0
      %290 = vmatprep.subr.bf16.mxu0 0
      %291 = vmatpush1.bf16.msra.mxu0 0
      %292 = vmatprep.subr.bf16.mxu0 0
      %293 = vmatpush1.bf16.msra.mxu0 0
      %294 = vmatprep.subr.bf16.mxu0 0
      %295 = vmatpush1.bf16.msra.mxu0 0
      %296 = vmatprep.subr.bf16.mxu0 0
      %297 = vmatpush1.bf16.msra.mxu0 0
      %298 = vmatprep.subr.bf16.mxu0 0
      %299 = vmatpush1.bf16.msra.mxu0 0
      %300 = vmatprep.mubr.bf16.mxu0 0
      %301 = vmatmul.mubr.bf16.gmra.mrb[0].mxu0 %v267
      %v302 = vpop.f32.mrb[0].mxu0
      %v303 = vadd.f32 0.0, %v302
      %v304 = vpop.f32.mrb[0].mxu0
      %v305 = vadd.f32 0.0, %v304
      %v306 = vpop.f32.mrb[0].mxu0
      %v307 = vpop.f32.mrb[0].mxu0
      %308 = vdwg.mxu0
      %309 = vmatprep.subr.bf16.mxu0 %v100
      %310 = vmatpush1.bf16.msra.mxu0 %v99
      %311 = vmatprep.subr.bf16.mxu0 %v104
      %312 = vmatpush1.bf16.msra.mxu0 %v103
      %313 = vmatprep.subr.bf16.mxu0 %v108
      %314 = vmatpush1.bf16.msra.mxu0 %v107
      %315 = vmatprep.subr.bf16.mxu0 %v112
      %316 = vmatpush1.bf16.msra.mxu0 %v111
      %317 = vmatprep.subr.bf16.mxu0 %v116
      %318 = vmatpush1.bf16.msra.mxu0 %v115
      %319 = vmatprep.subr.bf16.mxu0 %v120
      %320 = vmatpush1.bf16.msra.mxu0 %v119
      %321 = vmatprep.subr.bf16.mxu0 %v124
      %322 = vmatpush1.bf16.msra.mxu0 %v123
      %323 = vmatprep.subr.bf16.mxu0 %v128
      %324 = vmatpush1.bf16.msra.mxu0 %v127
      %325 = vmatprep.subr.bf16.mxu0 0
      %326 = vmatpush1.bf16.msra.mxu0 0
      %327 = vmatprep.subr.bf16.mxu0 0
      %328 = vmatpush1.bf16.msra.mxu0 0
      %329 = vmatprep.subr.bf16.mxu0 0
      %330 = vmatpush1.bf16.msra.mxu0 0
      %331 = vmatprep.subr.bf16.mxu0 0
      %332 = vmatpush1.bf16.msra.mxu0 0
      %333 = vmatprep.subr.bf16.mxu0 0
      %334 = vmatpush1.bf16.msra.mxu0 0
      %335 = vmatprep.subr.bf16.mxu0 0
      %336 = vmatpush1.bf16.msra.mxu0 0
      %337 = vmatprep.subr.bf16.mxu0 0
      %338 = vmatpush1.bf16.msra.mxu0 0
      %339 = vmatprep.subr.bf16.mxu0 0
      %340 = vmatpush1.bf16.msra.mxu0 0
      %341 = vmatprep.mubr.bf16.mxu0 0
      %342 = vmatmul.mubr.bf16.gmra.mrb[0].mxu0 %v267
      %v343 = vpop.f32.mrb[0].mxu0
      %v344 = vadd.f32 0.0, %v343
      %v345 = vpop.f32.mrb[0].mxu0
      %v346 = vadd.f32 0.0, %v345
      %v347 = vpop.f32.mrb[0].mxu0
      %v348 = vpop.f32.mrb[0].mxu0
      %349 = vdwg.mxu0
      %v350 = vadd.f32 %v263, %v303
      %v351 = vadd.f32 %v264, %v305
      %v352 = vadd.f32 %v265, %v344
      %v353 = vadd.f32 %v266, %v346
      %v354 = vxor.u32 %v350, 2147483648
      %v355 = vmul.f32 %v354, 1.442695
      %v356 = vpow.pop %v355
      %v357 = vadd.f32 %v356, 1.0
      %v358 = vrcp.pop %v357
      %v359 = vmul.f32 1.0, %v358
      %v360 = vxor.u32 %v351, 2147483648
      %v361 = vmul.f32 %v360, 1.442695
      %v362 = vpow.pop %v361
      %v363 = vadd.f32 %v362, 1.0
      %v364 = vrcp.pop %v363
      %v365 = vmul.f32 1.0, %v364
      %v366 = vtanh.pop %v352
      %v367 = vxor.u32 %v353, 2147483648
      %v368 = vmul.f32 %v367, 1.442695
      %v369 = vpow.pop %v368
      %v370 = vadd.f32 %v369, 1.0
      %v371 = vrcp.pop %v370
      %v372 = vmul.f32 1.0, %v371
      %v373 = vmul.f32 %v365, %v256
      %v374 = vmul.f32 %v359, %v366
      %v375 = vadd.f32 %v373, %v374
      %v376 = vtanh.pop %v375
      %v377 = vmul.f32 %v372, %v376
      %s378 = sadd.s32 %s91, 1
      %v379 = vstv %s378
      %vm380 = vcmp.gt.s32.totalorder %v129, %v379
      %v381 = vsel %vm380, 1, 0
      %382 = vset.pattern.permute.xlu0 0
      %383 = vperm.xlu0 %382, %v381
      %v384 = vpop.permute.xlu0 %383
      %vm385 = vcmp.eq.s32.totalorder %v384, 1
      %v386 = vsel %vm385, %v375, %v256
      %v387 = vsel %vm385, %v377, %v257
      %v388 = vsel %vm385, %v377, 0.0
      %s389 = scalar_lea.vmem [#allocation13], 8
      %390 = vst [vmem:[%s389] sm:$0xff] %v388
      %s391 = scalar_lea.vmem [#allocation8], 32
      %v392 = vld [vmem:[%s391] sm:$0xff]
      %v393 = vld [vmem:[%s391 + $0x8] sm:$0xff]
      %v394 = vunpack.c.l.bf16 %v392
      %v395 = vunpack.c.h.bf16 %v392
      %v396 = vunpack.c.l.bf16 %v393
      %v397 = vunpack.c.h.bf16 %v393
      %v398 = vpack.c.bf16 %v387, %v387
      %399 = vmatprep.subr.bf16.mxu0 %v98
      %400 = vmatpush1.bf16.msra.mxu0 %v97
      %401 = vmatprep.subr.bf16.mxu0 %v102
      %402 = vmatpush1.bf16.msra.mxu0 %v101
      %403 = vmatprep.subr.bf16.mxu0 %v106
      %404 = vmatpush1.bf16.msra.mxu0 %v105
      %405 = vmatprep.subr.bf16.mxu0 %v110
      %406 = vmatpush1.bf16.msra.mxu0 %v109
      %407 = vmatprep.subr.bf16.mxu0 %v114
      %408 = vmatpush1.bf16.msra.mxu0 %v113
      %409 = vmatprep.subr.bf16.mxu0 %v118
      %410 = vmatpush1.bf16.msra.mxu0 %v117
      %411 = vmatprep.subr.bf16.mxu0 %v122
      %412 = vmatpush1.bf16.msra.mxu0 %v121
      %413 = vmatprep.subr.bf16.mxu0 %v126
      %414 = vmatpush1.bf16.msra.mxu0 %v125
      %415 = vmatprep.subr.bf16.mxu0 0
      %416 = vmatpush1.bf16.msra.mxu0 0
      %417 = vmatprep.subr.bf16.mxu0 0
      %418 = vmatpush1.bf16.msra.mxu0 0
      %419 = vmatprep.subr.bf16.mxu0 0
      %420 = vmatpush1.bf16.msra.mxu0 0
      %421 = vmatprep.subr.bf16.mxu0 0
      %422 = vmatpush1.bf16.msra.mxu0 0
      %423 = vmatprep.subr.bf16.mxu0 0
      %424 = vmatpush1.bf16.msra.mxu0 0
      %425 = vmatprep.subr.bf16.mxu0 0
      %426 = vmatpush1.bf16.msra.mxu0 0
      %427 = vmatprep.subr.bf16.mxu0 0
      %428 = vmatpush1.bf16.msra.mxu0 0
      %429 = vmatprep.subr.bf16.mxu0 0
      %430 = vmatpush1.bf16.msra.mxu0 0
      %431 = vmatprep.mubr.bf16.mxu0 0
      %432 = vmatmul.mubr.bf16.gmra.mrb[0].mxu0 %v398
      %v433 = vpop.f32.mrb[0].mxu0
      %v434 = vadd.f32 0.0, %v433
      %v435 = vpop.f32.mrb[0].mxu0
      %v436 = vadd.f32 0.0, %v435
      %v437 = vpop.f32.mrb[0].mxu0
      %v438 = vpop.f32.mrb[0].mxu0
      %439 = vdwg.mxu0
      %440 = vmatprep.subr.bf16.mxu0 %v100
      %441 = vmatpush1.bf16.msra.mxu0 %v99
      %442 = vmatprep.subr.bf16.mxu0 %v104
      %443 = vmatpush1.bf16.msra.mxu0 %v103
      %444 = vmatprep.subr.bf16.mxu0 %v108
      %445 = vmatpush1.bf16.msra.mxu0 %v107
      %446 = vmatprep.subr.bf16.mxu0 %v112
      %447 = vmatpush1.bf16.msra.mxu0 %v111
      %448 = vmatprep.subr.bf16.mxu0 %v116
      %449 = vmatpush1.bf16.msra.mxu0 %v115
      %450 = vmatprep.subr.bf16.mxu0 %v120
      %451 = vmatpush1.bf16.msra.mxu0 %v119
      %452 = vmatprep.subr.bf16.mxu0 %v124
      %453 = vmatpush1.bf16.msra.mxu0 %v123
      %454 = vmatprep.subr.bf16.mxu0 %v128
      %455 = vmatpush1.bf16.msra.mxu0 %v127
      %456 = vmatprep.subr.bf16.mxu0 0
      %457 = vmatpush1.bf16.msra.mxu0 0
      %458 = vmatprep.subr.bf16.mxu0 0
      %459 = vmatpush1.bf16.msra.mxu0 0
      %460 = vmatprep.subr.bf16.mxu0 0
      %461 = vmatpush1.bf16.msra.mxu0 0
      %462 = vmatprep.subr.bf16.mxu0 0
      %463 = vmatpush1.bf16.msra.mxu0 0
      %464 = vmatprep.subr.bf16.mxu0 0
      %465 = vmatpush1.bf16.msra.mxu0 0
      %466 = vmatprep.subr.bf16.mxu0 0
      %467 = vmatpush1.bf16.msra.mxu0 0
      %468 = vmatprep.subr.bf16.mxu0 0
      %469 = vmatpush1.bf16.msra.mxu0 0
      %470 = vmatprep.subr.bf16.mxu0 0
      %471 = vmatpush1.bf16.msra.mxu0 0
      %472 = vmatprep.mubr.bf16.mxu0 0
      %473 = vmatmul.mubr.bf16.gmra.mrb[0].mxu0 %v398
      %v474 = vpop.f32.mrb[0].mxu0
      %v475 = vadd.f32 0.0, %v474
      %v476 = vpop.f32.mrb[0].mxu0
      %v477 = vadd.f32 0.0, %v476
      %v478 = vpop.f32.mrb[0].mxu0
      %v479 = vpop.f32.mrb[0].mxu0
      %480 = vdwg.mxu0
      %v481 = vadd.f32 %v394, %v434
      %v482 = vadd.f32 %v395, %v436
      %v483 = vadd.f32 %v396, %v475
      %v484 = vadd.f32 %v397, %v477
      %v485 = vxor.u32 %v481, 2147483648
      %v486 = vmul.f32 %v485, 1.442695
      %v487 = vpow.pop %v486
      %v488 = vadd.f32 %v487, 1.0
      %v489 = vrcp.pop %v488
      %v490 = vmul.f32 1.0, %v489
      %v491 = vxor.u32 %v482, 2147483648
      %v492 = vmul.f32 %v491, 1.442695
      %v493 = vpow.pop %v492
      %v494 = vadd.f32 %v493, 1.0
      %v495 = vrcp.pop %v494
      %v496 = vmul.f32 1.0, %v495
      %v497 = vtanh.pop %v483
      %v498 = vxor.u32 %v484, 2147483648
      %v499 = vmul.f32 %v498, 1.442695
      %v500 = vpow.pop %v499
      %v501 = vadd.f32 %v500, 1.0
      %v502 = vrcp.pop %v501
      %v503 = vmul.f32 1.0, %v502
      %v504 = vmul.f32 %v496, %v386
      %v505 = vmul.f32 %v490, %v497
      %v506 = vadd.f32 %v504, %v505
      %v507 = vtanh.pop %v506
      %v508 = vmul.f32 %v503, %v507
      %s509 = sadd.s32 %s91, 2
      %v510 = vstv %s509
      %vm511 = vcmp.gt.s32.totalorder %v129, %v510
      %v512 = vsel %vm511, 1, 0
      %513 = vset.pattern.permute.xlu0 0
      %514 = vperm.xlu0 %513, %v512
      %v515 = vpop.permute.xlu0 %514
      %vm516 = vcmp.eq.s32.totalorder %v515, 1
      %v517 = vsel %vm516, %v506, %v386
      %v518 = vsel %vm516, %v508, %v387
      %v519 = vsel %vm516, %v508, 0.0
      %s520 = scalar_lea.vmem [#allocation13], 16
      %521 = vst [vmem:[%s520] sm:$0xff] %v519
      %s522 = scalar_lea.vmem [#allocation8], 48
      %v523 = vld [vmem:[%s522] sm:$0xff]
      %v524 = vld [vmem:[%s522 + $0x8] sm:$0xff]
      %v525 = vunpack.c.l.bf16 %v523
      %v526 = vunpack.c.h.bf16 %v523
      %v527 = vunpack.c.l.bf16 %v524
      %v528 = vunpack.c.h.bf16 %v524
      %v529 = vpack.c.bf16 %v518, %v518
      %530 = vmatprep.subr.bf16.mxu0 %v98
      %531 = vmatpush1.bf16.msra.mxu0 %v97
      %532 = vmatprep.subr.bf16.mxu0 %v102
      %533 = vmatpush1.bf16.msra.mxu0 %v101
      %534 = vmatprep.subr.bf16.mxu0 %v106
      %535 = vmatpush1.bf16.msra.mxu0 %v105
      %536 = vmatprep.subr.bf16.mxu0 %v110
      %537 = vmatpush1.bf16.msra.mxu0 %v109
      %538 = vmatprep.subr.bf16.mxu0 %v114
      %539 = vmatpush1.bf16.msra.mxu0 %v113
      %540 = vmatprep.subr.bf16.mxu0 %v118
      %541 = vmatpush1.bf16.msra.mxu0 %v117
      %542 = vmatprep.subr.bf16.mxu0 %v122
      %543 = vmatpush1.bf16.msra.mxu0 %v121
      %544 = vmatprep.subr.bf16.mxu0 %v126
      %545 = vmatpush1.bf16.msra.mxu0 %v125
      %546 = vmatprep.subr.bf16.mxu0 0
      %547 = vmatpush1.bf16.msra.mxu0 0
      %548 = vmatprep.subr.bf16.mxu0 0
      %549 = vmatpush1.bf16.msra.mxu0 0
      %550 = vmatprep.subr.bf16.mxu0 0
      %551 = vmatpush1.bf16.msra.mxu0 0
      %552 = vmatprep.subr.bf16.mxu0 0
      %553 = vmatpush1.bf16.msra.mxu0 0
      %554 = vmatprep.subr.bf16.mxu0 0
      %555 = vmatpush1.bf16.msra.mxu0 0
      %556 = vmatprep.subr.bf16.mxu0 0
      %557 = vmatpush1.bf16.msra.mxu0 0
      %558 = vmatprep.subr.bf16.mxu0 0
      %559 = vmatpush1.bf16.msra.mxu0 0
      %560 = vmatprep.subr.bf16.mxu0 0
      %561 = vmatpush1.bf16.msra.mxu0 0
      %562 = vmatprep.mubr.bf16.mxu0 0
      %563 = vmatmul.mubr.bf16.gmra.mrb[0].mxu0 %v529
      %v564 = vpop.f32.mrb[0].mxu0
      %v565 = vadd.f32 0.0, %v564
      %v566 = vpop.f32.mrb[0].mxu0
      %v567 = vadd.f32 0.0, %v566
      %v568 = vpop.f32.mrb[0].mxu0
      %v569 = vpop.f32.mrb[0].mxu0
      %570 = vdwg.mxu0
      %571 = vmatprep.subr.bf16.mxu0 %v100
      %572 = vmatpush1.bf16.msra.mxu0 %v99
      %573 = vmatprep.subr.bf16.mxu0 %v104
      %574 = vmatpush1.bf16.msra.mxu0 %v103
      %575 = vmatprep.subr.bf16.mxu0 %v108
      %576 = vmatpush1.bf16.msra.mxu0 %v107
      %577 = vmatprep.subr.bf16.mxu0 %v112
      %578 = vmatpush1.bf16.msra.mxu0 %v111
      %579 = vmatprep.subr.bf16.mxu0 %v116
      %580 = vmatpush1.bf16.msra.mxu0 %v115
      %581 = vmatprep.subr.bf16.mxu0 %v120
      %582 = vmatpush1.bf16.msra.mxu0 %v119
      %583 = vmatprep.subr.bf16.mxu0 %v124
      %584 = vmatpush1.bf16.msra.mxu0 %v123
      %585 = vmatprep.subr.bf16.mxu0 %v128
      %586 = vmatpush1.bf16.msra.mxu0 %v127
      %587 = vmatprep.subr.bf16.mxu0 0
      %588 = vmatpush1.bf16.msra.mxu0 0
      %589 = vmatprep.subr.bf16.mxu0 0
      %590 = vmatpush1.bf16.msra.mxu0 0
      %591 = vmatprep.subr.bf16.mxu0 0
      %592 = vmatpush1.bf16.msra.mxu0 0
      %593 = vmatprep.subr.bf16.mxu0 0
      %594 = vmatpush1.bf16.msra.mxu0 0
      %595 = vmatprep.subr.bf16.mxu0 0
      %596 = vmatpush1.bf16.msra.mxu0 0
      %597 = vmatprep.subr.bf16.mxu0 0
      %598 = vmatpush1.bf16.msra.mxu0 0
      %599 = vmatprep.subr.bf16.mxu0 0
      %600 = vmatpush1.bf16.msra.mxu0 0
      %601 = vmatprep.subr.bf16.mxu0 0
      %602 = vmatpush1.bf16.msra.mxu0 0
      %603 = vmatprep.mubr.bf16.mxu0 0
      %604 = vmatmul.mubr.bf16.gmra.mrb[0].mxu0 %v529
      %v605 = vpop.f32.mrb[0].mxu0
      %v606 = vadd.f32 0.0, %v605
      %v607 = vpop.f32.mrb[0].mxu0
      %v608 = vadd.f32 0.0, %v607
      %v609 = vpop.f32.mrb[0].mxu0
      %v610 = vpop.f32.mrb[0].mxu0
      %611 = vdwg.mxu0
      %v612 = vadd.f32 %v525, %v565
      %v613 = vadd.f32 %v526, %v567
      %v614 = vadd.f32 %v527, %v606
      %v615 = vadd.f32 %v528, %v608
      %v616 = vxor.u32 %v612, 2147483648
      %v617 = vmul.f32 %v616, 1.442695
      %v618 = vpow.pop %v617
      %v619 = vadd.f32 %v618, 1.0
      %v620 = vrcp.pop %v619
      %v621 = vmul.f32 1.0, %v620
      %v622 = vxor.u32 %v613, 2147483648
      %v623 = vmul.f32 %v622, 1.442695
      %v624 = vpow.pop %v623
      %v625 = vadd.f32 %v624, 1.0
      %v626 = vrcp.pop %v625
      %v627 = vmul.f32 1.0, %v626
      %v628 = vtanh.pop %v614
      %v629 = vxor.u32 %v615, 2147483648
      %v630 = vmul.f32 %v629, 1.442695
      %v631 = vpow.pop %v630
      %v632 = vadd.f32 %v631, 1.0
      %v633 = vrcp.pop %v632
      %v634 = vmul.f32 1.0, %v633
      %v635 = vmul.f32 %v627, %v517
      %v636 = vmul.f32 %v621, %v628
      %v637 = vadd.f32 %v635, %v636
      %v638 = vtanh.pop %v637
      %v639 = vmul.f32 %v634, %v638
      %s640 = sadd.s32 %s91, 3
      %v641 = vstv %s640
      %vm642 = vcmp.gt.s32.totalorder %v129, %v641
      %v643 = vsel %vm642, 1, 0
      %644 = vset.pattern.permute.xlu0 0
      %645 = vperm.xlu0 %644, %v643
      %v646 = vpop.permute.xlu0 %645
      %vm647 = vcmp.eq.s32.totalorder %v646, 1
      %v648 = vsel %vm647, %v637, %v517
      %v649 = vsel %vm647, %v639, %v518
      %v650 = vsel %vm647, %v639, 0.0
      %s651 = scalar_lea.vmem [#allocation13], 24
      %652 = vst [vmem:[%s651] sm:$0xff] %v650
      %s653 = scalar_lea.vmem [#allocation8], 64
      %v654 = vld [vmem:[%s653] sm:$0xff]
      %v655 = vld [vmem:[%s653 + $0x8] sm:$0xff]
      %v656 = vunpack.c.l.bf16 %v654
      %v657 = vunpack.c.h.bf16 %v654
      %v658 = vunpack.c.l.bf16 %v655
      %v659 = vunpack.c.h.bf16 %v655
      %v660 = vpack.c.bf16 %v649, %v649
      %661 = vmatprep.subr.bf16.mxu0 %v98
      %662 = vmatpush1.bf16.msra.mxu0 %v97
      %663 = vmatprep.subr.bf16.mxu0 %v102
      %664 = vmatpush1.bf16.msra.mxu0 %v101
      %665 = vmatprep.subr.bf16.mxu0 %v106
      %666 = vmatpush1.bf16.msra.mxu0 %v105
      %667 = vmatprep.subr.bf16.mxu0 %v110
      %668 = vmatpush1.bf16.msra.mxu0 %v109
      %669 = vmatprep.subr.bf16.mxu0 %v114
      %670 = vmatpush1.bf16.msra.mxu0 %v113
      %671 = vmatprep.subr.bf16.mxu0 %v118
      %672 = vmatpush1.bf16.msra.mxu0 %v117
      %673 = vmatprep.subr.bf16.mxu0 %v122
      %674 = vmatpush1.bf16.msra.mxu0 %v121
      %675 = vmatprep.subr.bf16.mxu0 %v126
      %676 = vmatpush1.bf16.msra.mxu0 %v125
      %677 = vmatprep.subr.bf16.mxu0 0
      %678 = vmatpush1.bf16.msra.mxu0 0
      %679 = vmatprep.subr.bf16.mxu0 0
      %680 = vmatpush1.bf16.msra.mxu0 0
      %681 = vmatprep.subr.bf16.mxu0 0
      %682 = vmatpush1.bf16.msra.mxu0 0
      %683 = vmatprep.subr.bf16.mxu0 0
      %684 = vmatpush1.bf16.msra.mxu0 0
      %685 = vmatprep.subr.bf16.mxu0 0
      %686 = vmatpush1.bf16.msra.mxu0 0
      %687 = vmatprep.subr.bf16.mxu0 0
      %688 = vmatpush1.bf16.msra.mxu0 0
      %689 = vmatprep.subr.bf16.mxu0 0
      %690 = vmatpush1.bf16.msra.mxu0 0
      %691 = vmatprep.subr.bf16.mxu0 0
      %692 = vmatpush1.bf16.msra.mxu0 0
      %693 = vmatprep.mubr.bf16.mxu0 0
      %694 = vmatmul.mubr.bf16.gmra.mrb[0].mxu0 %v660
      %v695 = vpop.f32.mrb[0].mxu0
      %v696 = vadd.f32 0.0, %v695
      %v697 = vpop.f32.mrb[0].mxu0
      %v698 = vadd.f32 0.0, %v697
      %v699 = vpop.f32.mrb[0].mxu0
      %v700 = vpop.f32.mrb[0].mxu0
      %701 = vdwg.mxu0
      %702 = vmatprep.subr.bf16.mxu0 %v100
      %703 = vmatpush1.bf16.msra.mxu0 %v99
      %704 = vmatprep.subr.bf16.mxu0 %v104
      %705 = vmatpush1.bf16.msra.mxu0 %v103
      %706 = vmatprep.subr.bf16.mxu0 %v108
      %707 = vmatpush1.bf16.msra.mxu0 %v107
      %708 = vmatprep.subr.bf16.mxu0 %v112
      %709 = vmatpush1.bf16.msra.mxu0 %v111
      %710 = vmatprep.subr.bf16.mxu0 %v116
      %711 = vmatpush1.bf16.msra.mxu0 %v115
      %712 = vmatprep.subr.bf16.mxu0 %v120
      %713 = vmatpush1.bf16.msra.mxu0 %v119
      %714 = vmatprep.subr.bf16.mxu0 %v124
      %715 = vmatpush1.bf16.msra.mxu0 %v123
      %716 = vmatprep.subr.bf16.mxu0 %v128
      %717 = vmatpush1.bf16.msra.mxu0 %v127
      %718 = vmatprep.subr.bf16.mxu0 0
      %719 = vmatpush1.bf16.msra.mxu0 0
      %720 = vmatprep.subr.bf16.mxu0 0
      %721 = vmatpush1.bf16.msra.mxu0 0
      %722 = vmatprep.subr.bf16.mxu0 0
      %723 = vmatpush1.bf16.msra.mxu0 0
      %724 = vmatprep.subr.bf16.mxu0 0
      %725 = vmatpush1.bf16.msra.mxu0 0
      %726 = vmatprep.subr.bf16.mxu0 0
      %727 = vmatpush1.bf16.msra.mxu0 0
      %728 = vmatprep.subr.bf16.mxu0 0
      %729 = vmatpush1.bf16.msra.mxu0 0
      %730 = vmatprep.subr.bf16.mxu0 0
      %731 = vmatpush1.bf16.msra.mxu0 0
      %732 = vmatprep.subr.bf16.mxu0 0
      %733 = vmatpush1.bf16.msra.mxu0 0
      %734 = vmatprep.mubr.bf16.mxu0 0
      %735 = vmatmul.mubr.bf16.gmra.mrb[0].mxu0 %v660
      %v736 = vpop.f32.mrb[0].mxu0
      %v737 = vadd.f32 0.0, %v736
      %v738 = vpop.f32.mrb[0].mxu0
      %v739 = vadd.f32 0.0, %v738
      %v740 = vpop.f32.mrb[0].mxu0
      %v741 = vpop.f32.mrb[0].mxu0
      %742 = vdwg.mxu0
      %v743 = vadd.f32 %v656, %v696
      %v744 = vadd.f32 %v657, %v698
      %v745 = vadd.f32 %v658, %v737
      %v746 = vadd.f32 %v659, %v739
      %v747 = vxor.u32 %v743, 2147483648
      %v748 = vmul.f32 %v747, 1.442695
      %v749 = vpow.pop %v748
      %v750 = vadd.f32 %v749, 1.0
      %v751 = vrcp.pop %v750
      %v752 = vmul.f32 1.0, %v751
      %v753 = vxor.u32 %v744, 2147483648
      %v754 = vmul.f32 %v753, 1.442695
      %v755 = vpow.pop %v754
      %v756 = vadd.f32 %v755, 1.0
      %v757 = vrcp.pop %v756
      %v758 = vmul.f32 1.0, %v757
      %v759 = vtanh.pop %v745
      %v760 = vxor.u32 %v746, 2147483648
      %v761 = vmul.f32 %v760, 1.442695
      %v762 = vpow.pop %v761
      %v763 = vadd.f32 %v762, 1.0
      %v764 = vrcp.pop %v763
      %v765 = vmul.f32 1.0, %v764
      %v766 = vmul.f32 %v758, %v648
      %v767 = vmul.f32 %v752, %v759
      %v768 = vadd.f32 %v766, %v767
      %v769 = vtanh.pop %v768
      %v770 = vmul.f32 %v765, %v769
      %s771 = sadd.s32 %s91, 4
      %v772 = vstv %s771
      %vm773 = vcmp.gt.s32.totalorder %v129, %v772
      %v774 = vsel %vm773, 1, 0
      %775 = vset.pattern.permute.xlu0 0
      %776 = vperm.xlu0 %775, %v774
      %v777 = vpop.permute.xlu0 %776
      %vm778 = vcmp.eq.s32.totalorder %v777, 1
      %v779 = vsel %vm778, %v768, %v648
      %v780 = vsel %vm778, %v770, %v649
      %v781 = vsel %vm778, %v770, 0.0
      %s782 = scalar_lea.vmem [#allocation13], 32
      %783 = vst [vmem:[%s782] sm:$0xff] %v781
      %s784 = scalar_lea.vmem [#allocation8], 80
      %v785 = vld [vmem:[%s784] sm:$0xff]
      %v786 = vld [vmem:[%s784 + $0x8] sm:$0xff]
      %v787 = vunpack.c.l.bf16 %v785
      %v788 = vunpack.c.h.bf16 %v785
      %v789 = vunpack.c.l.bf16 %v786
      %v790 = vunpack.c.h.bf16 %v786
      %v791 = vpack.c.bf16 %v780, %v780
      %792 = vmatprep.subr.bf16.mxu0 %v98
      %793 = vmatpush1.bf16.msra.mxu0 %v97
      %794 = vmatprep.subr.bf16.mxu0 %v102
      %795 = vmatpush1.bf16.msra.mxu0 %v101
      %796 = vmatprep.subr.bf16.mxu0 %v106
      %797 = vmatpush1.bf16.msra.mxu0 %v105
      %798 = vmatprep.subr.bf16.mxu0 %v110
      %799 = vmatpush1.bf16.msra.mxu0 %v109
      %800 = vmatprep.subr.bf16.mxu0 %v114
      %801 = vmatpush1.bf16.msra.mxu0 %v113
      %802 = vmatprep.subr.bf16.mxu0 %v118
      %803 = vmatpush1.bf16.msra.mxu0 %v117
      %804 = vmatprep.subr.bf16.mxu0 %v122
      %805 = vmatpush1.bf16.msra.mxu0 %v121
      %806 = vmatprep.subr.bf16.mxu0 %v126
      %807 = vmatpush1.bf16.msra.mxu0 %v125
      %808 = vmatprep.subr.bf16.mxu0 0
      %809 = vmatpush1.bf16.msra.mxu0 0
      %810 = vmatprep.subr.bf16.mxu0 0
      %811 = vmatpush1.bf16.msra.mxu0 0
      %812 = vmatprep.subr.bf16.mxu0 0
      %813 = vmatpush1.bf16.msra.mxu0 0
      %814 = vmatprep.subr.bf16.mxu0 0
      %815 = vmatpush1.bf16.msra.mxu0 0
      %816 = vmatprep.subr.bf16.mxu0 0
      %817 = vmatpush1.bf16.msra.mxu0 0
      %818 = vmatprep.subr.bf16.mxu0 0
      %819 = vmatpush1.bf16.msra.mxu0 0
      %820 = vmatprep.subr.bf16.mxu0 0
      %821 = vmatpush1.bf16.msra.mxu0 0
      %822 = vmatprep.subr.bf16.mxu0 0
      %823 = vmatpush1.bf16.msra.mxu0 0
      %824 = vmatprep.mubr.bf16.mxu0 0
      %825 = vmatmul.mubr.bf16.gmra.mrb[0].mxu0 %v791
      %v826 = vpop.f32.mrb[0].mxu0
      %v827 = vadd.f32 0.0, %v826
      %v828 = vpop.f32.mrb[0].mxu0
      %v829 = vadd.f32 0.0, %v828
      %v830 = vpop.f32.mrb[0].mxu0
      %v831 = vpop.f32.mrb[0].mxu0
      %832 = vdwg.mxu0
      %833 = vmatprep.subr.bf16.mxu0 %v100
      %834 = vmatpush1.bf16.msra.mxu0 %v99
      %835 = vmatprep.subr.bf16.mxu0 %v104
      %836 = vmatpush1.bf16.msra.mxu0 %v103
      %837 = vmatprep.subr.bf16.mxu0 %v108
      %838 = vmatpush1.bf16.msra.mxu0 %v107
      %839 = vmatprep.subr.bf16.mxu0 %v112
      %840 = vmatpush1.bf16.msra.mxu0 %v111
      %841 = vmatprep.subr.bf16.mxu0 %v116
      %842 = vmatpush1.bf16.msra.mxu0 %v115
      %843 = vmatprep.subr.bf16.mxu0 %v120
      %844 = vmatpush1.bf16.msra.mxu0 %v119
      %845 = vmatprep.subr.bf16.mxu0 %v124
      %846 = vmatpush1.bf16.msra.mxu0 %v123
      %847 = vmatprep.subr.bf16.mxu0 %v128
      %848 = vmatpush1.bf16.msra.mxu0 %v127
      %849 = vmatprep.subr.bf16.mxu0 0
      %850 = vmatpush1.bf16.msra.mxu0 0
      %851 = vmatprep.subr.bf16.mxu0 0
      %852 = vmatpush1.bf16.msra.mxu0 0
      %853 = vmatprep.subr.bf16.mxu0 0
      %854 = vmatpush1.bf16.msra.mxu0 0
      %855 = vmatprep.subr.bf16.mxu0 0
      %856 = vmatpush1.bf16.msra.mxu0 0
      %857 = vmatprep.subr.bf16.mxu0 0
      %858 = vmatpush1.bf16.msra.mxu0 0
      %859 = vmatprep.subr.bf16.mxu0 0
      %860 = vmatpush1.bf16.msra.mxu0 0
      %861 = vmatprep.subr.bf16.mxu0 0
      %862 = vmatpush1.bf16.msra.mxu0 0
      %863 = vmatprep.subr.bf16.mxu0 0
      %864 = vmatpush1.bf16.msra.mxu0 0
      %865 = vmatprep.mubr.bf16.mxu0 0
      %866 = vmatmul.mubr.bf16.gmra.mrb[0].mxu0 %v791
      %v867 = vpop.f32.mrb[0].mxu0
      %v868 = vadd.f32 0.0, %v867
      %v869 = vpop.f32.mrb[0].mxu0
      %v870 = vadd.f32 0.0, %v869
      %v871 = vpop.f32.mrb[0].mxu0
      %v872 = vpop.f32.mrb[0].mxu0
      %873 = vdwg.mxu0
      %v874 = vadd.f32 %v787, %v827
      %v875 = vadd.f32 %v788, %v829
      %v876 = vadd.f32 %v789, %v868
      %v877 = vadd.f32 %v790, %v870
      %v878 = vxor.u32 %v874, 2147483648
      %v879 = vmul.f32 %v878, 1.442695
      %v880 = vpow.pop %v879
      %v881 = vadd.f32 %v880, 1.0
      %v882 = vrcp.pop %v881
      %v883 = vmul.f32 1.0, %v882
      %v884 = vxor.u32 %v875, 2147483648
      %v885 = vmul.f32 %v884, 1.442695
      %v886 = vpow.pop %v885
      %v887 = vadd.f32 %v886, 1.0
      %v888 = vrcp.pop %v887
      %v889 = vmul.f32 1.0, %v888
      %v890 = vtanh.pop %v876
      %v891 = vxor.u32 %v877, 2147483648
      %v892 = vmul.f32 %v891, 1.442695
      %v893 = vpow.pop %v892
      %v894 = vadd.f32 %v893, 1.0
      %v895 = vrcp.pop %v894
      %v896 = vmul.f32 1.0, %v895
      %v897 = vmul.f32 %v889, %v779
      %v898 = vmul.f32 %v883, %v890
      %v899 = vadd.f32 %v897, %v898
      %v900 = vtanh.pop %v899
      %v901 = vmul.f32 %v896, %v900
      %s902 = sadd.s32 %s91, 5
      %v903 = vstv %s902
      %vm904 = vcmp.gt.s32.totalorder %v129, %v903
      %v905 = vsel %vm904, 1, 0
      %906 = vset.pattern.permute.xlu0 0
      %907 = vperm.xlu0 %906, %v905
      %v908 = vpop.permute.xlu0 %907
      %vm909 = vcmp.eq.s32.totalorder %v908, 1
      %v910 = vsel %vm909, %v899, %v779
      %v911 = vsel %vm909, %v901, %v780
      %v912 = vsel %vm909, %v901, 0.0
      %s913 = scalar_lea.vmem [#allocation13], 40
      %914 = vst [vmem:[%s913] sm:$0xff] %v912
      %s915 = scalar_lea.vmem [#allocation8], 96
      %v916 = vld [vmem:[%s915] sm:$0xff]
      %v917 = vld [vmem:[%s915 + $0x8] sm:$0xff]
      %v918 = vunpack.c.l.bf16 %v916
      %v919 = vunpack.c.h.bf16 %v916
      %v920 = vunpack.c.l.bf16 %v917
      %v921 = vunpack.c.h.bf16 %v917
      %v922 = vpack.c.bf16 %v911, %v911
      %923 = vmatprep.subr.bf16.mxu0 %v98
      %924 = vmatpush1.bf16.msra.mxu0 %v97
      %925 = vmatprep.subr.bf16.mxu0 %v102
      %926 = vmatpush1.bf16.msra.mxu0 %v101
      %927 = vmatprep.subr.bf16.mxu0 %v106
      %928 = vmatpush1.bf16.msra.mxu0 %v105
      %929 = vmatprep.subr.bf16.mxu0 %v110
      %930 = vmatpush1.bf16.msra.mxu0 %v109
      %931 = vmatprep.subr.bf16.mxu0 %v114
      %932 = vmatpush1.bf16.msra.mxu0 %v113
      %933 = vmatprep.subr.bf16.mxu0 %v118
      %934 = vmatpush1.bf16.msra.mxu0 %v117
      %935 = vmatprep.subr.bf16.mxu0 %v122
      %936 = vmatpush1.bf16.msra.mxu0 %v121
      %937 = vmatprep.subr.bf16.mxu0 %v126
      %938 = vmatpush1.bf16.msra.mxu0 %v125
      %939 = vmatprep.subr.bf16.mxu0 0
      %940 = vmatpush1.bf16.msra.mxu0 0
      %941 = vmatprep.subr.bf16.mxu0 0
      %942 = vmatpush1.bf16.msra.mxu0 0
      %943 = vmatprep.subr.bf16.mxu0 0
      %944 = vmatpush1.bf16.msra.mxu0 0
      %945 = vmatprep.subr.bf16.mxu0 0
      %946 = vmatpush1.bf16.msra.mxu0 0
      %947 = vmatprep.subr.bf16.mxu0 0
      %948 = vmatpush1.bf16.msra.mxu0 0
      %949 = vmatprep.subr.bf16.mxu0 0
      %950 = vmatpush1.bf16.msra.mxu0 0
      %951 = vmatprep.subr.bf16.mxu0 0
      %952 = vmatpush1.bf16.msra.mxu0 0
      %953 = vmatprep.subr.bf16.mxu0 0
      %954 = vmatpush1.bf16.msra.mxu0 0
      %955 = vmatprep.mubr.bf16.mxu0 0
      %956 = vmatmul.mubr.bf16.gmra.mrb[0].mxu0 %v922
      %v957 = vpop.f32.mrb[0].mxu0
      %v958 = vadd.f32 0.0, %v957
      %v959 = vpop.f32.mrb[0].mxu0
      %v960 = vadd.f32 0.0, %v959
      %v961 = vpop.f32.mrb[0].mxu0
      %v962 = vpop.f32.mrb[0].mxu0
      %963 = vdwg.mxu0
      %964 = vmatprep.subr.bf16.mxu0 %v100
      %965 = vmatpush1.bf16.msra.mxu0 %v99
      %966 = vmatprep.subr.bf16.mxu0 %v104
      %967 = vmatpush1.bf16.msra.mxu0 %v103
      %968 = vmatprep.subr.bf16.mxu0 %v108
      %969 = vmatpush1.bf16.msra.mxu0 %v107
      %970 = vmatprep.subr.bf16.mxu0 %v112
      %971 = vmatpush1.bf16.msra.mxu0 %v111
      %972 = vmatprep.subr.bf16.mxu0 %v116
      %973 = vmatpush1.bf16.msra.mxu0 %v115
      %974 = vmatprep.subr.bf16.mxu0 %v120
      %975 = vmatpush1.bf16.msra.mxu0 %v119
      %976 = vmatprep.subr.bf16.mxu0 %v124
      %977 = vmatpush1.bf16.msra.mxu0 %v123
      %978 = vmatprep.subr.bf16.mxu0 %v128
      %979 = vmatpush1.bf16.msra.mxu0 %v127
      %980 = vmatprep.subr.bf16.mxu0 0
      %981 = vmatpush1.bf16.msra.mxu0 0
      %982 = vmatprep.subr.bf16.mxu0 0
      %983 = vmatpush1.bf16.msra.mxu0 0
      %984 = vmatprep.subr.bf16.mxu0 0
      %985 = vmatpush1.bf16.msra.mxu0 0
      %986 = vmatprep.subr.bf16.mxu0 0
      %987 = vmatpush1.bf16.msra.mxu0 0
      %988 = vmatprep.subr.bf16.mxu0 0
      %989 = vmatpush1.bf16.msra.mxu0 0
      %990 = vmatprep.subr.bf16.mxu0 0
      %991 = vmatpush1.bf16.msra.mxu0 0
      %992 = vmatprep.subr.bf16.mxu0 0
      %993 = vmatpush1.bf16.msra.mxu0 0
      %994 = vmatprep.subr.bf16.mxu0 0
      %995 = vmatpush1.bf16.msra.mxu0 0
      %996 = vmatprep.mubr.bf16.mxu0 0
      %997 = vmatmul.mubr.bf16.gmra.mrb[0].mxu0 %v922
      %v998 = vpop.f32.mrb[0].mxu0
      %v999 = vadd.f32 0.0, %v998
      %v1000 = vpop.f32.mrb[0].mxu0
      %v1001 = vadd.f32 0.0, %v1000
      %v1002 = vpop.f32.mrb[0].mxu0
      %v1003 = vpop.f32.mrb[0].mxu0
      %1004 = vdwg.mxu0
      %v1005 = vadd.f32 %v918, %v958
      %v1006 = vadd.f32 %v919, %v960
      %v1007 = vadd.f32 %v920, %v999
      %v1008 = vadd.f32 %v921, %v1001
      %v1009 = vxor.u32 %v1005, 2147483648
      %v1010 = vmul.f32 %v1009, 1.442695
      %v1011 = vpow.pop %v1010
      %v1012 = vadd.f32 %v1011, 1.0
      %v1013 = vrcp.pop %v1012
      %v1014 = vmul.f32 1.0, %v1013
      %v1015 = vxor.u32 %v1006, 2147483648
      %v1016 = vmul.f32 %v1015, 1.442695
      %v1017 = vpow.pop %v1016
      %v1018 = vadd.f32 %v1017, 1.0
      %v1019 = vrcp.pop %v1018
      %v1020 = vmul.f32 1.0, %v1019
      %v1021 = vtanh.pop %v1007
      %v1022 = vxor.u32 %v1008, 2147483648
      %v1023 = vmul.f32 %v1022, 1.442695
      %v1024 = vpow.pop %v1023
      %v1025 = vadd.f32 %v1024, 1.0
      %v1026 = vrcp.pop %v1025
      %v1027 = vmul.f32 1.0, %v1026
      %v1028 = vmul.f32 %v1020, %v910
      %v1029 = vmul.f32 %v1014, %v1021
      %v1030 = vadd.f32 %v1028, %v1029
      %v1031 = vtanh.pop %v1030
      %v1032 = vmul.f32 %v1027, %v1031
      %s1033 = sadd.s32 %s91, 6
      %v1034 = vstv %s1033
      %vm1035 = vcmp.gt.s32.totalorder %v129, %v1034
      %v1036 = vsel %vm1035, 1, 0
      %1037 = vset.pattern.permute.xlu0 0
      %1038 = vperm.xlu0 %1037, %v1036
      %v1039 = vpop.permute.xlu0 %1038
      %vm1040 = vcmp.eq.s32.totalorder %v1039, 1
      %v1041 = vsel %vm1040, %v1030, %v910
      %v1042 = vsel %vm1040, %v1032, %v911
      %v1043 = vsel %vm1040, %v1032, 0.0
      %s1044 = scalar_lea.vmem [#allocation13], 48
      %1045 = vst [vmem:[%s1044] sm:$0xff] %v1043
      %s1046 = scalar_lea.vmem [#allocation8], 112
      %v1047 = vld [vmem:[%s1046] sm:$0xff]
      %v1048 = vld [vmem:[%s1046 + $0x8] sm:$0xff]
      %v1049 = vunpack.c.l.bf16 %v1047
      %v1050 = vunpack.c.h.bf16 %v1047
      %v1051 = vunpack.c.l.bf16 %v1048
      %v1052 = vunpack.c.h.bf16 %v1048
      %v1053 = vpack.c.bf16 %v1042, %v1042
      %1054 = vmatprep.subr.bf16.mxu0 %v98
      %1055 = vmatpush1.bf16.msra.mxu0 %v97
      %1056 = vmatprep.subr.bf16.mxu0 %v102
      %1057 = vmatpush1.bf16.msra.mxu0 %v101
      %1058 = vmatprep.subr.bf16.mxu0 %v106
      %1059 = vmatpush1.bf16.msra.mxu0 %v105
      %1060 = vmatprep.subr.bf16.mxu0 %v110
      %1061 = vmatpush1.bf16.msra.mxu0 %v109
      %1062 = vmatprep.subr.bf16.mxu0 %v114
      %1063 = vmatpush1.bf16.msra.mxu0 %v113
      %1064 = vmatprep.subr.bf16.mxu0 %v118
      %1065 = vmatpush1.bf16.msra.mxu0 %v117
      %1066 = vmatprep.subr.bf16.mxu0 %v122
      %1067 = vmatpush1.bf16.msra.mxu0 %v121
      %1068 = vmatprep.subr.bf16.mxu0 %v126
      %1069 = vmatpush1.bf16.msra.mxu0 %v125
      %1070 = vmatprep.subr.bf16.mxu0 0
      %1071 = vmatpush1.bf16.msra.mxu0 0
      %1072 = vmatprep.subr.bf16.mxu0 0
      %1073 = vmatpush1.bf16.msra.mxu0 0
      %1074 = vmatprep.subr.bf16.mxu0 0
      %1075 = vmatpush1.bf16.msra.mxu0 0
      %1076 = vmatprep.subr.bf16.mxu0 0
      %1077 = vmatpush1.bf16.msra.mxu0 0
      %1078 = vmatprep.subr.bf16.mxu0 0
      %1079 = vmatpush1.bf16.msra.mxu0 0
      %1080 = vmatprep.subr.bf16.mxu0 0
      %1081 = vmatpush1.bf16.msra.mxu0 0
      %1082 = vmatprep.subr.bf16.mxu0 0
      %1083 = vmatpush1.bf16.msra.mxu0 0
      %1084 = vmatprep.subr.bf16.mxu0 0
      %1085 = vmatpush1.bf16.msra.mxu0 0
      %1086 = vmatprep.mubr.bf16.mxu0 0
      %1087 = vmatmul.mubr.bf16.gmra.mrb[0].mxu0 %v1053
      %v1088 = vpop.f32.mrb[0].mxu0
      %v1089 = vadd.f32 0.0, %v1088
      %v1090 = vpop.f32.mrb[0].mxu0
      %v1091 = vadd.f32 0.0, %v1090
      %v1092 = vpop.f32.mrb[0].mxu0
      %v1093 = vpop.f32.mrb[0].mxu0
      %1094 = vdwg.mxu0
      %1095 = vmatprep.subr.bf16.mxu0 %v100
      %1096 = vmatpush1.bf16.msra.mxu0 %v99
      %1097 = vmatprep.subr.bf16.mxu0 %v104
      %1098 = vmatpush1.bf16.msra.mxu0 %v103
      %1099 = vmatprep.subr.bf16.mxu0 %v108
      %1100 = vmatpush1.bf16.msra.mxu0 %v107
      %1101 = vmatprep.subr.bf16.mxu0 %v112
      %1102 = vmatpush1.bf16.msra.mxu0 %v111
      %1103 = vmatprep.subr.bf16.mxu0 %v116
      %1104 = vmatpush1.bf16.msra.mxu0 %v115
      %1105 = vmatprep.subr.bf16.mxu0 %v120
      %1106 = vmatpush1.bf16.msra.mxu0 %v119
      %1107 = vmatprep.subr.bf16.mxu0 %v124
      %1108 = vmatpush1.bf16.msra.mxu0 %v123
      %1109 = vmatprep.subr.bf16.mxu0 %v128
      %1110 = vmatpush1.bf16.msra.mxu0 %v127
      %1111 = vmatprep.subr.bf16.mxu0 0
      %1112 = vmatpush1.bf16.msra.mxu0 0
      %1113 = vmatprep.subr.bf16.mxu0 0
      %1114 = vmatpush1.bf16.msra.mxu0 0
      %1115 = vmatprep.subr.bf16.mxu0 0
      %1116 = vmatpush1.bf16.msra.mxu0 0
      %1117 = vmatprep.subr.bf16.mxu0 0
      %1118 = vmatpush1.bf16.msra.mxu0 0
      %1119 = vmatprep.subr.bf16.mxu0 0
      %1120 = vmatpush1.bf16.msra.mxu0 0
      %1121 = vmatprep.subr.bf16.mxu0 0
      %1122 = vmatpush1.bf16.msra.mxu0 0
      %1123 = vmatprep.subr.bf16.mxu0 0
      %1124 = vmatpush1.bf16.msra.mxu0 0
      %1125 = vmatprep.subr.bf16.mxu0 0
      %1126 = vmatpush1.bf16.msra.mxu0 0
      %1127 = vmatprep.mubr.bf16.mxu0 0
      %1128 = vmatmul.mubr.bf16.gmra.mrb[0].mxu0 %v1053
      %v1129 = vpop.f32.mrb[0].mxu0
      %v1130 = vadd.f32 0.0, %v1129
      %v1131 = vpop.f32.mrb[0].mxu0
      %v1132 = vadd.f32 0.0, %v1131
      %v1133 = vpop.f32.mrb[0].mxu0
      %v1134 = vpop.f32.mrb[0].mxu0
      %1135 = vdwg.mxu0
      %v1136 = vadd.f32 %v1049, %v1089
      %v1137 = vadd.f32 %v1050, %v1091
      %v1138 = vadd.f32 %v1051, %v1130
      %v1139 = vadd.f32 %v1052, %v1132
      %v1140 = vxor.u32 %v1136, 2147483648
      %v1141 = vmul.f32 %v1140, 1.442695
      %v1142 = vpow.pop %v1141
      %v1143 = vadd.f32 %v1142, 1.0
      %v1144 = vrcp.pop %v1143
      %v1145 = vmul.f32 1.0, %v1144
      %v1146 = vxor.u32 %v1137, 2147483648
      %v1147 = vmul.f32 %v1146, 1.442695
      %v1148 = vpow.pop %v1147
      %v1149 = vadd.f32 %v1148, 1.0
      %v1150 = vrcp.pop %v1149
      %v1151 = vmul.f32 1.0, %v1150
      %v1152 = vtanh.pop %v1138
      %v1153 = vxor.u32 %v1139, 2147483648
      %v1154 = vmul.f32 %v1153, 1.442695
      %v1155 = vpow.pop %v1154
      %v1156 = vadd.f32 %v1155, 1.0
      %v1157 = vrcp.pop %v1156
      %v1158 = vmul.f32 1.0, %v1157
      %v1159 = vmul.f32 %v1151, %v1041
      %v1160 = vmul.f32 %v1145, %v1152
      %v1161 = vadd.f32 %v1159, %v1160
      %v1162 = vtanh.pop %v1161
      %v1163 = vmul.f32 %v1158, %v1162
      %s1164 = sadd.s32 %s91, 7
      %v1165 = vstv %s1164
      %vm1166 = vcmp.gt.s32.totalorder %v129, %v1165
      %v1167 = vsel %vm1166, 1, 0
      %1168 = vset.pattern.permute.xlu0 0
      %1169 = vperm.xlu0 %1168, %v1167
      %v1170 = vpop.permute.xlu0 %1169
      %vm1171 = vcmp.eq.s32.totalorder %v1170, 1
      %v1172 = vsel %vm1171, %v1161, %v1041
      %v1173 = vsel %vm1171, %v1163, %v1042
      %v1174 = vsel %vm1171, %v1163, 0.0
      %s1175 = scalar_lea.vmem [#allocation13], 56
      %1176 = vst [vmem:[%s1175] sm:$0xff] %v1174
      %1177 = vst [vmem:[#allocation4] sm:$0xff] %v1173
      %1178 = vst [vmem:[#allocation5] sm:$0xff] %v1172
    $region25: #{tpu_custom_call.1} parent=1 // pred_fallthru
      _
    %p1179 = scmp.ge.s32.totalorder %s91, %s92
    // Predicated region
    $region26: #{tpu_custom_call.1} parent=1 // pred_check
      %p1180 = pneg %p1179
    $region27: #{tpu_custom_call.1} parent=1 // pred_check_branch
      %1182 = sbr.rel (%p1180) target = $region29
    $region28: #{tpu_custom_call.1} parent=1 // pred_region
      %1183 = vst [vmem:[#allocation13] sm:$0xff] 0.0
      %1184 = vst [vmem:[#allocation13 + $0x8] sm:$0xff] 0.0
      %1185 = vst [vmem:[#allocation13 + $0x10] sm:$0xff] 0.0
      %1186 = vst [vmem:[#allocation13 + $0x18] sm:$0xff] 0.0
      %1187 = vst [vmem:[#allocation13 + $0x20] sm:$0xff] 0.0
      %1188 = vst [vmem:[#allocation13 + $0x28] sm:$0xff] 0.0
      %1189 = vst [vmem:[#allocation13 + $0x30] sm:$0xff] 0.0
      %1190 = vst [vmem:[#allocation13 + $0x38] sm:$0xff] 0.0
    $region29: #{tpu_custom_call.1} parent=1 // pred_fallthru
      _
    // Predicated region
    $region30: #{tpu_custom_call.1} parent=1 // pred_check
      %p1191 = pneg %p46
    $region31: #{tpu_custom_call.1} parent=1 // pred_check_branch
      %1193 = sbr.rel (%p1191) target = $region33
    $region32: #{tpu_custom_call.1} parent=1 // pred_region
      %v1194 = vld [vmem:[#allocation4] sm:$0xff]
      %1195 = vst [vmem:[#allocation14] sm:$0xff] %v1194
      %v1196 = vld [vmem:[#allocation5] sm:$0xff]
      %1197 = vst [vmem:[#allocation16] sm:$0xff] %v1196
    $region33: #{tpu_custom_call.1} parent=1 // pred_fallthru
      _
    // Predicated region
    $region34: #{tpu_custom_call.1} parent=1 // pred_check
      _
    $region35: #{tpu_custom_call.1} parent=1 // pred_check_branch
      %1199 = sbr.rel (0) target = $region37
    $region36: #{tpu_custom_call.1} parent=1 // pred_region
      %s1201 = ssub.s32 1024, 1024
      %1202 = vsyncadd [#allocation10], %s1201
      %s1203 = sshll.u32 [#allocation13], 4
      %s1204 = int_to_ptr.vmem [resolvable:$true] %s1203
      %1209 = dma.vmem_to_hbm [thread:$0]  %s1204, 1024, %s4, [#allocation10], 128, 128, 8
    $region37: #{tpu_custom_call.1} parent=1 // pred_fallthru
      _
    // Predicated region
    $region38: #{tpu_custom_call.1} parent=1 // pred_check
      _
    $region39: #{tpu_custom_call.1} parent=1 // pred_check_branch
      %1211 = sbr.rel (0) target = $region41
    $region40: #{tpu_custom_call.1} parent=1 // pred_region
      %s1213 = ssub.s32 128, 128
      %1214 = vsyncadd [#allocation15], %s1213
      %s1216 = sshll.u32 [#allocation14], 4
      %s1217 = int_to_ptr.vmem [resolvable:$true] %s1216
      %1219 = dma.vmem_to_hbm [thread:$0]  %s1217, 128, %s5, [#allocation15]
    $region41: #{tpu_custom_call.1} parent=1 // pred_fallthru
      _
    // Predicated region
    $region42: #{tpu_custom_call.1} parent=1 // pred_check
      _
    $region43: #{tpu_custom_call.1} parent=1 // pred_check_branch
      %1221 = sbr.rel (0) target = $region45
    $region44: #{tpu_custom_call.1} parent=1 // pred_region
      %s1223 = ssub.s32 128, 128
      %1224 = vsyncadd [#allocation15], %s1223
      %s1226 = sshll.u32 [#allocation16], 4
      %s1227 = int_to_ptr.vmem [resolvable:$true] %s1226
      %1229 = dma.vmem_to_hbm [thread:$0]  %s1227, 128, %s6, [#allocation15]
    $region45: #{tpu_custom_call.1} parent=1 // pred_fallthru
      _
    // Predicated region
    $region46: #{tpu_custom_call.1} parent=1 // pred_check
      _
    $region47: #{tpu_custom_call.1} parent=1 // pred_check_branch
      %1231 = sbr.rel (0) target = $region49
    $region48: #{tpu_custom_call.1} parent=1 // pred_region
      %1232 = dma.done [#allocation10], 1024
    $region49: #{tpu_custom_call.1} parent=1 // pred_fallthru
      _
    // Predicated region
    $region50: #{tpu_custom_call.1} parent=1 // pred_check
      _
    $region51: #{tpu_custom_call.1} parent=1 // pred_check_branch
      %1234 = sbr.rel (0) target = $region53
    $region52: #{tpu_custom_call.1} parent=1 // pred_region
      %1235 = dma.done [#allocation15], 128
    $region53: #{tpu_custom_call.1} parent=1 // pred_fallthru
      _
    // Predicated region
    $region54: #{tpu_custom_call.1} parent=1 // pred_check
      _
    $region55: #{tpu_custom_call.1} parent=1 // pred_check_branch
      %1237 = sbr.rel (0) target = $region57
    $region56: #{tpu_custom_call.1} parent=1 // pred_region
      %1238 = dma.done [#allocation15], 128
    $region57: #{tpu_custom_call.1} parent=1 // pred_fallthru
      _
    %1239 = vsyncpa [#allocation9], 1
    %1240 = vsyncpa [#allocation12], 1
    %1241 = vsyncpa [#allocation10], 1
    %1242 = vsyncpa [#allocation15], 1
  %1243 = vsyncmov [#allocation3]
  %s1244 = vpop.sfrf %1243
  %p1245 = scmp.eq.s32.totalorder %s1244, 0
  %p1246 = pneg %p1245
  %1248 = shalt.err (%p1246)

</llo_original>
